<compile_context>
chip_gen: v7x
topology: tpu7x:2x2x1
jax: 0.10.0
libtpu: 0.0.40
codegen_flags: <defaults>
</compile_context>

<pallas_src>
import jax
import jax.numpy as jnp
from jax.experimental import pallas as pl
from jax.experimental.pallas import tpu as pltpu

_MiB = 1 << 20
_LANE = 128
_SUBLANE = 8
_FAST_PATH_BYTES = 256 * 1024          # below this, XLA's fused matmul wins
_HIGHEST = jax.lax.Precision.HIGHEST   # f32-parity MXU passes (hidden under DMA)


def _round_up(x, m):
    return ((x + m - 1) // m) * m


def _round_down(x, m):
    return max(m, (x // m) * m)


def _vmem_capacity_bytes():
    # Generation-aware VMEM capacity (64 MiB/TensorCore on v7x, 128 MiB on v5e/v6e).
    try:
        info = pltpu.get_tpu_info()
        cap = int(getattr(info, "vmem_capacity_bytes", 0))
        if cap > 0:
            return cap
    except Exception:
        pass
    return 64 * _MiB  # conservative default (v7x per-core)


_VMEM_CAP = _vmem_capacity_bytes()
# Scoped-VMEM budget handed to Mosaic: ~50 MiB on v7x, ~100 MiB on v5e/v6e.
_VMEM_BUDGET = (_VMEM_CAP * 25) // 32
# Per-block activation byte target: ~4 MiB on v7x, ~8 MiB on v5e/v6e.
_BLOCK_TARGET = _VMEM_CAP // 16
# Keep a resident (single-buffered) weight only up to this size.
_W_RESIDENT_LIMIT = min(_VMEM_BUDGET // 3, 24 * _MiB)


def _compiler_params(dim_sems, vmem_bytes_needed):
    # Always set the limit explicitly: per-generation defaults (16 MiB on v5e,
    # 32 MiB elsewhere) are easily exceeded, and the cap must stay well under
    # v7x's 64 MiB physical VMEM while using v5e/v6e's 128 MiB when available.
    limit = int(min(_VMEM_BUDGET, max(vmem_bytes_needed * 5 // 4, 32 * _MiB)))
    return pltpu.CompilerParams(dimension_semantics=dim_sems,
                                vmem_limit_bytes=limit)


def _weight_plan(O, C):
    """Return (o_tile, resident): resident whole-weight vs O-tiled weight."""
    w_bytes = 4 * O * C
    if w_bytes <= _W_RESIDENT_LIMIT or O % _LANE != 0:
        # Resident single-buffered weight. (If O is not a lane multiple AND the
        # weight is huge we still keep it resident -- rare; the vmem limit is
        # raised accordingly.)
        return O, True
    # Tile output channels: double-buffered (to, C) blocks within ~1/3 budget.
    to = min(_round_down((_VMEM_BUDGET // 3) // (2 * 4 * C), _LANE), O)
    while O % to != 0:          # O % 128 == 0 here, so to == 128 always works
        to -= _LANE
    return to, False


# ----------------------------- kernels --------------------------------------


def _pa_fc_kernel(w_ref, x_ref, o_ref):
    # w_ref: (TO, C); x_ref: (TM, C); o_ref: (TM, TO)  -- lane-dense on O.
    # Contract over C directly on the (O, C) weight (no wrapper transpose).
    o_ref[...] = jax.lax.dot_general(
        x_ref[...], w_ref[...],
        dimension_numbers=(((1,), (1,)), ((), ())),
        precision=_HIGHEST,
        preferred_element_type=jnp.float32,
    ).astype(o_ref.dtype)


def _pa_conv_kernel(w_ref, x_ref, o_ref):
    # w_ref: (TO, C); x_ref: (C, THW); o_ref: (TO, THW).
    # One MXU matmul per grid step; the batch dim is handled by the grid.
    o_ref[...] = jnp.dot(
        w_ref[...], x_ref[...],
        precision=_HIGHEST,
        preferred_element_type=jnp.float32,
    ).astype(o_ref.dtype)


# ----------------------------- wrappers --------------------------------------


def _pa_fc(x2, w2d):
    """x2: (M, C); w2d: (O, C). Returns (M, O) = x2 @ w2d.T (lane-dense on O)."""
    M, C = x2.shape
    O = w2d.shape[0]
    to, resident = _weight_plan(O, C)
    w_pipe_bytes = 4 * O * C if resident else 2 * 4 * to * C

    # Row tile: generation-aware target, bounded by what fits next to the weight.
    avail = max(_VMEM_BUDGET * 4 // 5 - w_pipe_bytes, 2 * _MiB)
    row_bytes = 4 * (C + to)
    tm_fit = _round_down(avail // (2 * row_bytes), _SUBLANE)
    tm_tgt = _round_down(max(_BLOCK_TARGET // (4 * C), _SUBLANE), _SUBLANE)
    tm = max(_SUBLANE, min(tm_fit, tm_tgt, 4096, _round_up(M, _SUBLANE)))
    if M >= 16 and pl.cdiv(M, tm) < 2:       # keep >= 2 grid steps for megacore
        tm = _round_up(pl.cdiv(M, 2), _SUBLANE)

    m_pad = _round_up(M, tm)
    x2p = x2 if m_pad == M else jnp.pad(x2, ((0, m_pad - M), (0, 0)))

    vmem_need = w_pipe_bytes + 2 * 4 * tm * (C + to)
    cost = pl.CostEstimate(
        flops=2 * m_pad * O * C,
        transcendentals=0,
        bytes_accessed=4 * (m_pad * C + m_pad * O + O * C),
    )

    if resident:
        y = pl.pallas_call(
            _pa_fc_kernel,
            out_shape=jax.ShapeDtypeStruct((m_pad, O), x2.dtype),
            grid=(m_pad // tm,),
            in_specs=[
                # Whole weight placed in VMEM once: single-buffered, no per-step DMA.
                pl.BlockSpec(memory_space=pltpu.MemorySpace.VMEM),
                pl.BlockSpec((tm, C), lambda m: (m, 0)),
            ],
            out_specs=pl.BlockSpec((tm, O), lambda m: (m, 0)),
            compiler_params=_compiler_params(("parallel",), vmem_need),
            cost_estimate=cost,
        )(w2d, x2p)
    else:
        y = pl.pallas_call(
            _pa_fc_kernel,
            out_shape=jax.ShapeDtypeStruct((m_pad, O), x2.dtype),
            grid=(O // to, m_pad // tm),     # o outermost: each weight block fetched once
            in_specs=[
                pl.BlockSpec((to, C), lambda o, m: (o, 0)),
                pl.BlockSpec((tm, C), lambda o, m: (m, 0)),
            ],
            out_specs=pl.BlockSpec((tm, to), lambda o, m: (m, o)),
            compiler_params=_compiler_params(("parallel", "parallel"), vmem_need),
            cost_estimate=cost,
        )(w2d, x2p)
    return y[:M] if m_pad != M else y


def _pick_thw(hw_pad, C, to, n_batch, avail_bytes):
    """Largest multiple-of-128 divisor of hw_pad fitting the VMEM budget/target."""
    col_bytes = 4 * (C + to)
    fit_cols = _round_down(avail_bytes // (2 * col_bytes), _LANE)
    tgt_cols = _round_down(max(_BLOCK_TARGET // (4 * C), _LANE), _LANE)
    limit = max(_LANE, min(fit_cols, tgt_cols, hw_pad))
    if n_batch == 1 and hw_pad >= 2 * _LANE:
        limit = min(limit, hw_pad // 2)      # keep >= 2 grid steps for megacore
    d = _round_down(limit, _LANE)
    while d > _LANE and hw_pad % d != 0:
        d -= _LANE
    return d


def _pa_conv(x3, w2d):
    """x3: (N, C, HW) with HW a multiple of 128; returns (N, O, HW)."""
    N, C, HW = x3.shape
    O = w2d.shape[0]
    to, resident = _weight_plan(O, C)
    w_pipe_bytes = 4 * O * C if resident else 2 * 4 * to * C
    avail = max(_VMEM_BUDGET * 4 // 5 - w_pipe_bytes, 2 * _MiB)
    thw = _pick_thw(HW, C, to, N, avail)

    vmem_need = w_pipe_bytes + 2 * 4 * thw * (C + to)
    cost = pl.CostEstimate(
        flops=2 * N * O * C * HW,
        transcendentals=0,
        bytes_accessed=4 * (N * C * HW + N * O * HW + O * C),
    )

    if resident:
        return pl.pallas_call(
            _pa_conv_kernel,
            out_shape=jax.ShapeDtypeStruct((N, O, HW), x3.dtype),
            grid=(N, HW // thw),
            in_specs=[
                pl.BlockSpec(memory_space=pltpu.MemorySpace.VMEM),   # resident weight
                pl.BlockSpec((None, C, thw), lambda n, s: (n, 0, s)),
            ],
            out_specs=pl.BlockSpec((None, O, thw), lambda n, s: (n, 0, s)),
            compiler_params=_compiler_params(("parallel", "parallel"), vmem_need),
            cost_estimate=cost,
        )(w2d, x3)

    return pl.pallas_call(
        _pa_conv_kernel,
        out_shape=jax.ShapeDtypeStruct((N, O, HW), x3.dtype),
        grid=(O // to, N, HW // thw),        # o outermost: weight block fetched once per o
        in_specs=[
            pl.BlockSpec((to, C), lambda o, n, s: (o, 0)),
            pl.BlockSpec((None, C, thw), lambda o, n, s: (n, 0, s)),
        ],
        out_specs=pl.BlockSpec((None, to, thw), lambda o, n, s: (n, o, s)),
        compiler_params=_compiler_params(("parallel",) * 3, vmem_need),
        cost_estimate=cost,
    )(w2d, x3)


def pa_forward(x, weight):
    """Forward of the PA module: conv2d(x, weight).flatten(1).

    x: (N, C) or (N, C, H, W); weight: (feat_dim, feat_dim, 1, 1).
    Returns (N, feat_dim * H * W) in channel-major (NCHW-flatten) order.
    """
    O, C = weight.shape[0], weight.shape[1]
    w2d = weight.reshape(O, C)               # 1x1 conv kernel -> plain matrix

    out_elems = (x.size // C) * O
    # Tiny-problem fast path: pallas_call launch / padding overhead dominates.
    if 4 * (x.size + out_elems + O * C) <= _FAST_PATH_BYTES:
        if x.ndim == 2:
            return jnp.einsum("nc,oc->no", x, w2d, precision=_HIGHEST)
        n = x.shape[0]
        y = jnp.einsum("oc,nchw->nohw", w2d, x, precision=_HIGHEST)
        return y.reshape(n, -1)

    if x.ndim == 2:
        return _pa_fc(x, w2d)

    N, Cx, H, W = x.shape
    HW = H * W
    if HW == 1:
        return _pa_fc(x.reshape(N, Cx), w2d)

    if HW < _LANE:
        # Small spatial extent: route through the lane-dense FC path on an NHWC
        # view so kernel output stores are full 128-lane vst's, not masked
        # partial stores; the layout plumbing stays in the XLA wrapper.
        xf = jnp.transpose(x, (0, 2, 3, 1)).reshape(N * HW, Cx)
        yf = _pa_fc(xf, w2d)                                     # (N*HW, O)
        return jnp.transpose(yf.reshape(N, HW, O), (0, 2, 1)).reshape(N, O * HW)

    # Channel-mixing 1x1 conv on (N, C, HW): pad HW to a lane multiple so every
    # block is lane-dense and spatial tiles stay bounded (never full-extent).
    hw_pad = _round_up(HW, _LANE)
    x3 = x.reshape(N, Cx, HW)
    if hw_pad != HW:
        x3 = jnp.pad(x3, ((0, 0), (0, 0), (0, hw_pad - HW)))
    y = _pa_conv(x3, w2d)                                        # (N, O, hw_pad)
    if hw_pad != HW:
        y = y[:, :, :HW]
    return y.reshape(N, O * HW)


if __name__ == "__main__":
    key = jax.random.PRNGKey(0)
    k_w, k1, k2, k3, k4 = jax.random.split(key, 5)

    feat_dim = 128
    # The module initializes weight to ones, but it is trainable; use random
    # values for a stronger check of the channel-mixing semantics.
    weight = jax.random.normal(k_w, (feat_dim, feat_dim, 1, 1), dtype=jnp.float32)
    w2 = weight.reshape(feat_dim, feat_dim)

    def ref_conv(xx):
        return jnp.einsum("oc,nchw->nohw", w2, xx,
                          precision=_HIGHEST).reshape(xx.shape[0], -1)

    # ---- 4D input, lane-aligned spatial (conv path) ----
    x_a = jax.random.normal(k1, (4, feat_dim, 16, 16), dtype=jnp.float32)
    out_a = jax.block_until_ready(pa_forward(x_a, weight))
    assert out_a.shape == (4, feat_dim * 256)
    assert jnp.allclose(out_a, ref_conv(x_a), atol=5e-2, rtol=2e-2)

    # ---- 4D input, spatial not a multiple of 128 (padded conv path) ----
    x_b = jax.random.normal(k2, (2, feat_dim, 14, 14), dtype=jnp.float32)
    out_b = jax.block_until_ready(pa_forward(x_b, weight))
    assert out_b.shape == (2, feat_dim * 196)
    assert jnp.allclose(out_b, ref_conv(x_b), atol=5e-2, rtol=2e-2)

    # ---- 4D input, small spatial (< 128) -> lane-dense NHWC/FC route ----
    x_c = jax.random.normal(k3, (8, feat_dim, 8, 8), dtype=jnp.float32)
    out_c = jax.block_until_ready(pa_forward(x_c, weight))
    assert out_c.shape == (8, feat_dim * 64)
    assert jnp.allclose(out_c, ref_conv(x_c), atol=5e-2, rtol=2e-2)

    # ---- 2D input (FC path) ----
    x_d = jax.random.normal(k4, (512, feat_dim), dtype=jnp.float32)
    out_d = jax.block_until_ready(pa_forward(x_d, weight))
    ref_d = jnp.einsum("nc,oc->no", x_d, w2, precision=_HIGHEST)
    assert out_d.shape == (512, feat_dim)
    assert jnp.allclose(out_d, ref_d, atol=5e-2, rtol=2e-2)

    # ---- tiny problem + default ones-initialized weight (fast path) ----
    w_ones = jnp.ones((32, 32, 1, 1), dtype=jnp.float32)
    x_e = jax.random.normal(k1, (2, 32, 4, 4), dtype=jnp.float32)
    out_e = jax.block_until_ready(pa_forward(x_e, w_ones))
    ref_e = jnp.broadcast_to(x_e.sum(axis=1, keepdims=True),
                             (2, 32, 4, 4)).reshape(2, -1)
    assert out_e.shape == (2, 32 * 16)
    assert jnp.allclose(out_e, ref_e, atol=5e-2, rtol=2e-2)

    print("KERNEL_OK")
</pallas_src>

<mosaic_0001>
module attributes {stable_mosaic.version = 11 : i64} {
  func.func @_pa_conv_kernel(%arg0: i32, %arg1: i32, %arg2: memref<128x128xf32, #tpu.memory_space<vmem>>, %arg3: memref<1x128x256xf32, #tpu.memory_space<vmem>>, %arg4: memref<1x128x256xf32, #tpu.memory_space<vmem>>) attributes {dimension_semantics = [#tpu.dimension_semantics<parallel>, #tpu.dimension_semantics<parallel>], iteration_bounds = array<i64: 4, 1>, scalar_prefetch = 0 : i64, scratch_operands = 0 : i64, tpu.core_type = #tpu.core_type<tc>, window_params = [{pipeline_mode = #tpu.pipeline_mode<synchronous>, transform_indices = @transform_0, window_bounds = array<i64: 128, 128>}, {transform_indices = @transform_1, window_bounds = array<i64: 1, 128, 256>}, {transform_indices = @transform_2, window_bounds = array<i64: 1, 128, 256>}]} {
    %c0 = arith.constant 0 : index
    %c0_0 = arith.constant 0 : index
    %0 = vector.load %arg2[%c0, %c0_0] : memref<128x128xf32, #tpu.memory_space<vmem>>, vector<128x128xf32>
    %c0_1 = arith.constant 0 : index
    %c0_2 = arith.constant 0 : index
    %c0_3 = arith.constant 0 : index
    %1 = vector.load %arg3[%c0_1, %c0_2, %c0_3] : memref<1x128x256xf32, #tpu.memory_space<vmem>>, vector<1x128x256xf32>
    %2 = vector.shape_cast %1 : vector<1x128x256xf32> to vector<128x256xf32>
    %cst = arith.constant dense<0.000000e+00> : vector<128x256xf32>
    %3 = tpu.matmul %0, %2, %cst {dimension_numbers = #tpu.dot_dimension_numbers<[1], [0], [0], [1], [0, 0, 1, 1], [], []>, precision = #tpu.contract_precision<fp32>} : vector<128x128xf32>, vector<128x256xf32>, vector<128x256xf32> -> vector<128x256xf32>
    %c0_4 = arith.constant 0 : index
    %c0_5 = arith.constant 0 : index
    %c0_6 = arith.constant 0 : index
    %4 = vector.load %arg4[%c0_4, %c0_5, %c0_6] : memref<1x128x256xf32, #tpu.memory_space<vmem>>, vector<1x128x256xf32>
    %5 = vector.shape_cast %4 : vector<1x128x256xf32> to vector<128x256xf32>
    %6 = vector.shape_cast %3 : vector<128x256xf32> to vector<1x128x256xf32>
    tpu.vector_store %arg4[%c0_4, %c0_5, %c0_6], %6 {strides = array<i32>} : memref<1x128x256xf32, #tpu.memory_space<vmem>>, vector<1x128x256xf32>,
    return
  }
  func.func @transform_0(%arg0: i32, %arg1: i32) -> (i32, i32) {
    %c0_i32 = arith.constant 0 : i32
    %c0_i32_0 = arith.constant 0 : i32
    %c0_i32_1 = arith.constant 0 : i32
    return %c0_i32, %c0_i32_0 : i32, i32
  }
  func.func @transform_1(%arg0: i32, %arg1: i32) -> (i32, i32, i32) {
    %c0_i32 = arith.constant 0 : i32
    %c0_i32_0 = arith.constant 0 : i32
    return %arg0, %c0_i32, %arg1 : i32, i32, i32
  }
  func.func @transform_2(%arg0: i32, %arg1: i32) -> (i32, i32, i32) {
    %c0_i32 = arith.constant 0 : i32
    %c0_i32_0 = arith.constant 0 : i32
    return %arg0, %c0_i32, %arg1 : i32, i32, i32
  }
}

</mosaic_0001>

<llo_original>
// kernel: tpu_custom_call.1
$region0: #{tpu_custom_call.1}
  #allocation0 [shape = 'u32[]', space=smem, size = 0x4, offset = 0x4, fixed_abs, tag = 'smem constant byte address 0x4 - core index']
  #allocation1 [shape = 'u32[144,128]{1,0:T(1,128)}', space=vmem, size = 0x12000, scoped, tag = 'internal scratch']
  %s0 = inlined_call_operand.hbm [shape: f32[128,128], index: 0, kind: input, shape index: {}]
  %s1 = inlined_call_operand.hbm [shape: f32[4,128,256], index: 1, kind: input, shape index: {}]
  %s2 = inlined_call_operand.hbm [shape: f32[4,128,256], index: 2, kind: output, shape index: {}]
  %s3 = sld [smem:[#allocation0]]
  $region49: #{tpu_custom_call.1} parent=0
    _
  %s5 = ssub.s32 1, %s3
  %s6 = scalar_select 0, %s5, %s3
  $region1: #{tpu_custom_call.1} parent=0
    #allocation2 [shape = 'u8[65536]{0}', space=vmem, size = 0x10000, scoped, tag = 'input window, operand 0, single buffered']
    #allocation3 [shape = 's32[2]{0}', space=sflag, size = 0x8, scoped, tag = 'scoped memory for tpu_custom_call.1']
    #allocation4 [shape = 's32[2]{0}', space=sflag, size = 0x8, scoped, tag = 'scoped memory for tpu_custom_call.1']
    #allocation5 [shape = 'u8[262144]{0}', space=vmem, size = 0x40000, scoped, tag = 'input window, operand 1']
    #allocation6 [shape = 's32[2]{0}', space=sflag, size = 0x8, scoped, tag = 'scoped memory for tpu_custom_call.1']
    #allocation7 [shape = 'u8[262144]{0}', space=vmem, size = 0x40000, scoped, tag = 'output window, operand 0']
    %7 = vsyncpa [#allocation3], 0
    %8 = vsyncpa [#allocation6], 0
    %s9 = scalar_lea.sflag [#allocation6], 1
    %10 = vsyncpa %s9, 0
    %11 = vsyncpa [#allocation4], 0
    %s12 = scalar_lea.sflag [#allocation4], 1
    %13 = vsyncpa %s12, 0
    loop: start=0, step=1, limit=6
    $region2: #{tpu_custom_call.1} parent=1 // loop_pre_header
      _
    $region3: #{tpu_custom_call.1} parent=1 // loop_header
      %s15 = sphi 0, %s19
      %p16 = scmp.ge.s32.totalorder %s15, 6
      %s22 = sphi 0, %s34
      %s23 = sphi 0, %s30
      %s24 = sphi 0, %s22
      %s25 = sphi 0, %s23
      %s26 = sphi 0, %s24
      %s27 = sphi 0, %s25
      %s35 = sphi 0, %s35
      %s37 = sphi 0, %s35
      %s38 = sphi 0, %s37
      %s52 = sphi 0, %s38
      %s60 = sphi 0, %s62
      %s63 = sphi 0, %s60
      %s64 = sphi 0, %s63
      %s80 = sphi 0, %s64
      %s88 = sphi 0, %s90
      %s91 = sphi 0, %s88
      %s92 = sphi 0, %s91
      %s108 = sphi 0, %s92
    $region4: #{tpu_custom_call.1} parent=1 // loop_header_branch
      %18 = sbr.rel (%p16) target = $region8
    $region5: #{tpu_custom_call.1} parent=1 // loop_body
      %s20 = ssub.s32 %s15, 1
      %s21 = ssub.s32 %s15, 2
      %s28 = sadd.s32 1, %s23
      %p29 = scmp.ge.s32.totalorder %s28, 1
      %s30 = scalar_select %p29, 0, %s28
      %s31 = sadd.s32 1, %s22
      %s32 = scalar_select %p29, %s31, %s22
      %p33 = scmp.ge.s32.totalorder %s32, 4
      %s34 = scalar_select %p33, 0, %s32
      %s36 = sadd.s32 %s35, 1
      %p39 = scmp.eq.s32.totalorder %s15, 3
      %p40 = scmp.ne.s32.totalorder %s35, %s37
      %p41 = scmp.eq.s32.totalorder %s15, 0
      %p42 = por %p40, %p41
      %p43 = scmp.ne.s32.totalorder %s35, %s37
      %p44 = scmp.eq.s32.totalorder %s20, 3
      %p45 = por %p43, %p44
      %p46 = scmp.ne.s32.totalorder %s37, %s38
      %p47 = scmp.eq.s32.totalorder %s20, 0
      %p48 = por %p46, %p47
      %p49 = scmp.ne.s32.totalorder %s37, %s38
      %p50 = scmp.eq.s32.totalorder %s21, 3
      %p51 = por %p49, %p50
      %p53 = scmp.ne.s32.totalorder %s38, %s52
      %p54 = scmp.eq.s32.totalorder %s21, 0
      %p55 = por %p53, %p54
      %s56 = ssub.s32 %s22, %s34
      %s57 = ssub.s32 %s23, %s30
      %s58 = sor.u32 %s56, %s57
      %p59 = scmp.eq.s32.totalorder %s58, 0
      %s61 = sadd.s32 %s60, 1
      %s62 = scalar_select %p59, %s60, %s61
      %p65 = pneg %p59
      %p66 = scmp.eq.s32.totalorder %s15, 3
      %p67 = por %p65, %p66
      %p68 = scmp.ne.s32.totalorder %s60, %s63
      %p69 = scmp.eq.s32.totalorder %s15, 0
      %p70 = por %p68, %p69
      %p71 = scmp.ne.s32.totalorder %s60, %s63
      %p72 = scmp.eq.s32.totalorder %s20, 3
      %p73 = por %p71, %p72
      %p74 = scmp.ne.s32.totalorder %s63, %s64
      %p75 = scmp.eq.s32.totalorder %s20, 0
      %p76 = por %p74, %p75
      %p77 = scmp.ne.s32.totalorder %s63, %s64
      %p78 = scmp.eq.s32.totalorder %s21, 3
      %p79 = por %p77, %p78
      %p81 = scmp.ne.s32.totalorder %s64, %s80
      %p82 = scmp.eq.s32.totalorder %s21, 0
      %p83 = por %p81, %p82
      %s84 = ssub.s32 %s22, %s34
      %s85 = ssub.s32 %s23, %s30
      %s86 = sor.u32 %s84, %s85
      %p87 = scmp.eq.s32.totalorder %s86, 0
      %s89 = sadd.s32 %s88, 1
      %s90 = scalar_select %p87, %s88, %s89
      %p93 = pneg %p87
      %p94 = scmp.eq.s32.totalorder %s15, 3
      %p95 = por %p93, %p94
      %p96 = scmp.ne.s32.totalorder %s88, %s91
      %p97 = scmp.eq.s32.totalorder %s15, 0
      %p98 = por %p96, %p97
      %p99 = scmp.ne.s32.totalorder %s88, %s91
      %p100 = scmp.eq.s32.totalorder %s20, 3
      %p101 = por %p99, %p100
      %p102 = scmp.ne.s32.totalorder %s91, %s92
      %p103 = scmp.eq.s32.totalorder %s20, 0
      %p104 = por %p102, %p103
      %p105 = scmp.ne.s32.totalorder %s91, %s92
      %p106 = scmp.eq.s32.totalorder %s21, 3
      %p107 = por %p105, %p106
      %p109 = scmp.ne.s32.totalorder %s92, %s108
      %p110 = scmp.eq.s32.totalorder %s21, 0
      %p111 = por %p109, %p110
      %p112 = scmp.le.s32.totalorder 1, %s15
      %p113 = scmp.lt.s32.totalorder %s15, 5
      %p114 = pnand %p112, %p113
      %p115 = pneg %p114
      // Predicated region
      $region9: #{tpu_custom_call.1} parent=5 // pred_check
        _
      $region10: #{tpu_custom_call.1} parent=5 // pred_check_branch
        %117 = sbr.rel (%p114) target = $region12
      $region11: #{tpu_custom_call.1} parent=5 // pred_region
        %s118 = ssub.s32 %s15, 1
        // Predicated region
        $region13: #{tpu_custom_call.1} parent=11 // pred_check
          %p119 = pneg %p48
        $region14: #{tpu_custom_call.1} parent=11 // pred_check_branch
          %121 = sbr.rel (%p119) target = $region16
        $region15: #{tpu_custom_call.1} parent=11 // pred_region
          %s123 = ssub.s32 2048, 2048
          %124 = vsyncadd [#allocation3], %s123
          %s125 = sshll.u32 [#allocation2], 4
          %s126 = int_to_ptr.vmem [resolvable:$true] %s125
          %131 = dma.hbm_to_vmem [thread:$0]  %s0, 2048, %s126, [#allocation3], 128, 128, 8
        $region16: #{tpu_custom_call.1} parent=11 // pred_fallthru
          _
      $region12: #{tpu_custom_call.1} parent=5 // pred_fallthru
        _
      %p132 = scmp.lt.s32.totalorder %s15, 4
      // Predicated region
      $region17: #{tpu_custom_call.1} parent=5 // pred_check
        %p133 = pneg %p132
      $region18: #{tpu_custom_call.1} parent=5 // pred_check_branch
        %135 = sbr.rel (%p133) target = $region20
      $region19: #{tpu_custom_call.1} parent=5 // pred_region
        // Predicated region
        $region21: #{tpu_custom_call.1} parent=19 // pred_check
          %p136 = pneg %p70
        $region22: #{tpu_custom_call.1} parent=19 // pred_check_branch
          %138 = sbr.rel (%p136) target = $region24
        $region23: #{tpu_custom_call.1} parent=19 // pred_region
          %s139 = sand.u32 %s60, 1
          %s140 = scalar_lea.sflag [#allocation6], %s139
          %s141 = sand.u32 %s60, 1
          %s142 = smul.addr %s141, 256
          %s143 = scalar_lea.vmem [#allocation5], %s142
          %s144 = smul.u32 2, %s23
          %s146 = ssub.s32 4096, 4096
          %147 = vsyncadd %s140, %s146
          %s148 = smul.addr %s22, 32
          %s149 = sadd.s32 %s144, %s148
          %s150 = smul.addr %s149, 128
          %s151 = scalar_lea.hbm %s1, %s150
          %s152 = sshll.u32 %s143, 4
          %s153 = int_to_ptr.vmem [resolvable:$true] %s152
          %158 = dma.hbm_to_vmem [thread:$0]  %s151, 4096, %s153, %s140, 256, 256, 16
        $region24: #{tpu_custom_call.1} parent=19 // pred_fallthru
          _
      $region20: #{tpu_custom_call.1} parent=5 // pred_fallthru
        _
      %p159 = scmp.le.s32.totalorder 1, %s15
      %p160 = scmp.lt.s32.totalorder %s15, 5
      %p161 = pnand %p159, %p160
      %p162 = pneg %p161
      // Predicated region
      $region25: #{tpu_custom_call.1} parent=5 // pred_check
        _
      $region26: #{tpu_custom_call.1} parent=5 // pred_check_branch
        %164 = sbr.rel (%p161) target = $region28
      $region27: #{tpu_custom_call.1} parent=5 // pred_region
        %s165 = ssub.s32 %s15, 1
        // Predicated region
        $region29: #{tpu_custom_call.1} parent=27 // pred_check
          %p166 = pneg %p48
        $region30: #{tpu_custom_call.1} parent=27 // pred_check_branch
          %168 = sbr.rel (%p166) target = $region32
        $region31: #{tpu_custom_call.1} parent=27 // pred_region
          %169 = dma.done [#allocation3], 2048
        $region32: #{tpu_custom_call.1} parent=27 // pred_fallthru
          _
        %s170 = sand.u32 %s63, 1
        %s171 = scalar_lea.sflag [#allocation6], %s170
        %s172 = sand.u32 %s63, 1
        %s173 = smul.addr %s172, 256
        %s174 = scalar_lea.vmem [#allocation5], %s173
        // Predicated region
        $region33: #{tpu_custom_call.1} parent=27 // pred_check
          %p175 = pneg %p76
        $region34: #{tpu_custom_call.1} parent=27 // pred_check_branch
          %177 = sbr.rel (%p175) target = $region36
        $region35: #{tpu_custom_call.1} parent=27 // pred_region
          %178 = dma.done %s171, 4096
        $region36: #{tpu_custom_call.1} parent=27 // pred_fallthru
          _
        %p179 = pneg %p48
        %p180 = pneg %p45
        %s181 = sand.u32 %s63, 1
        %s182 = scalar_lea.sflag [#allocation6], %s181
        %s183 = sand.u32 %s63, 1
        %s184 = smul.addr %s183, 256
        %s185 = scalar_lea.vmem [#allocation5], %s184
        %p186 = pneg %p76
        %p187 = pneg %p73
        %p188 = pneg %p104
        %p189 = pneg %p101
        %s190 = sand.u32 %s91, 1
        %s191 = scalar_lea.sflag [#allocation4], %s190
        %s192 = sand.u32 %s91, 1
        %s193 = smul.addr %s192, 256
        %s194 = scalar_lea.vmem [#allocation7], %s193
        %s195 = smul.u32 2, %s25
        %s196 = smul.u32 2, %s25
        %v197 = vld [vmem:[#allocation2] sm:$0xff]
        %v198 = vld [vmem:[#allocation2 + $0x8] sm:$0xff]
        %v199 = vld [vmem:[#allocation2 + $0x10] sm:$0xff]
        %v200 = vld [vmem:[#allocation2 + $0x18] sm:$0xff]
        %v201 = vld [vmem:[#allocation2 + $0x20] sm:$0xff]
        %v202 = vld [vmem:[#allocation2 + $0x28] sm:$0xff]
        %v203 = vld [vmem:[#allocation2 + $0x30] sm:$0xff]
        %v204 = vld [vmem:[#allocation2 + $0x38] sm:$0xff]
        %v205 = vld [vmem:[#allocation2 + $0x40] sm:$0xff]
        %v206 = vld [vmem:[#allocation2 + $0x48] sm:$0xff]
        %v207 = vld [vmem:[#allocation2 + $0x50] sm:$0xff]
        %v208 = vld [vmem:[#allocation2 + $0x58] sm:$0xff]
        %v209 = vld [vmem:[#allocation2 + $0x60] sm:$0xff]
        %v210 = vld [vmem:[#allocation2 + $0x68] sm:$0xff]
        %v211 = vld [vmem:[#allocation2 + $0x70] sm:$0xff]
        %v212 = vld [vmem:[#allocation2 + $0x78] sm:$0xff]
        %v213 = vld [vmem:[%s174] sm:$0xff]
        %v214 = vld [vmem:[%s174 + $0x8] sm:$0xff]
        %v215 = vld [vmem:[%s174 + $0x10] sm:$0xff]
        %v216 = vld [vmem:[%s174 + $0x18] sm:$0xff]
        %v217 = vld [vmem:[%s174 + $0x20] sm:$0xff]
        %v218 = vld [vmem:[%s174 + $0x28] sm:$0xff]
        %v219 = vld [vmem:[%s174 + $0x30] sm:$0xff]
        %v220 = vld [vmem:[%s174 + $0x38] sm:$0xff]
        %v221 = vld [vmem:[%s174 + $0x40] sm:$0xff]
        %v222 = vld [vmem:[%s174 + $0x48] sm:$0xff]
        %v223 = vld [vmem:[%s174 + $0x50] sm:$0xff]
        %v224 = vld [vmem:[%s174 + $0x58] sm:$0xff]
        %v225 = vld [vmem:[%s174 + $0x60] sm:$0xff]
        %v226 = vld [vmem:[%s174 + $0x68] sm:$0xff]
        %v227 = vld [vmem:[%s174 + $0x70] sm:$0xff]
        %v228 = vld [vmem:[%s174 + $0x78] sm:$0xff]
        %v229 = vld [vmem:[%s174 + $0x80] sm:$0xff]
        %v230 = vld [vmem:[%s174 + $0x88] sm:$0xff]
        %v231 = vld [vmem:[%s174 + $0x90] sm:$0xff]
        %v232 = vld [vmem:[%s174 + $0x98] sm:$0xff]
        %v233 = vld [vmem:[%s174 + $0xa0] sm:$0xff]
        %v234 = vld [vmem:[%s174 + $0xa8] sm:$0xff]
        %v235 = vld [vmem:[%s174 + $0xb0] sm:$0xff]
        %v236 = vld [vmem:[%s174 + $0xb8] sm:$0xff]
        %v237 = vld [vmem:[%s174 + $0xc0] sm:$0xff]
        %v238 = vld [vmem:[%s174 + $0xc8] sm:$0xff]
        %v239 = vld [vmem:[%s174 + $0xd0] sm:$0xff]
        %v240 = vld [vmem:[%s174 + $0xd8] sm:$0xff]
        %v241 = vld [vmem:[%s174 + $0xe0] sm:$0xff]
        %v242 = vld [vmem:[%s174 + $0xe8] sm:$0xff]
        %v243 = vld [vmem:[%s174 + $0xf0] sm:$0xff]
        %v244 = vld [vmem:[%s174 + $0xf8] sm:$0xff]
        %v245 = vand.u32 %v214, 4294901760
        %246 = vmatprep.subr.mxu0 %v245
        %v247 = vand.u32 %v213, 4294901760
        %248 = vmatpush1.msra.mxu0 %v247
        %v249 = vand.u32 %v216, 4294901760
        %250 = vmatprep.subr.mxu0 %v249
        %v251 = vand.u32 %v215, 4294901760
        %252 = vmatpush1.msra.mxu0 %v251
        %v253 = vand.u32 %v218, 4294901760
        %254 = vmatprep.subr.mxu0 %v253
        %v255 = vand.u32 %v217, 4294901760
        %256 = vmatpush1.msra.mxu0 %v255
        %v257 = vand.u32 %v220, 4294901760
        %258 = vmatprep.subr.mxu0 %v257
        %v259 = vand.u32 %v219, 4294901760
        %260 = vmatpush1.msra.mxu0 %v259
        %v261 = vand.u32 %v222, 4294901760
        %262 = vmatprep.subr.mxu0 %v261
        %v263 = vand.u32 %v221, 4294901760
        %264 = vmatpush1.msra.mxu0 %v263
        %v265 = vand.u32 %v224, 4294901760
        %266 = vmatprep.subr.mxu0 %v265
        %v267 = vand.u32 %v223, 4294901760
        %268 = vmatpush1.msra.mxu0 %v267
        %v269 = vand.u32 %v226, 4294901760
        %270 = vmatprep.subr.mxu0 %v269
        %v271 = vand.u32 %v225, 4294901760
        %272 = vmatpush1.msra.mxu0 %v271
        %v273 = vand.u32 %v228, 4294901760
        %274 = vmatprep.subr.mxu0 %v273
        %v275 = vand.u32 %v227, 4294901760
        %276 = vmatpush1.msra.mxu0 %v275
        %v277 = vand.u32 %v230, 4294901760
        %278 = vmatprep.subr.mxu0 %v277
        %v279 = vand.u32 %v229, 4294901760
        %280 = vmatpush1.msra.mxu0 %v279
        %v281 = vand.u32 %v232, 4294901760
        %282 = vmatprep.subr.mxu0 %v281
        %v283 = vand.u32 %v231, 4294901760
        %284 = vmatpush1.msra.mxu0 %v283
        %v285 = vand.u32 %v234, 4294901760
        %286 = vmatprep.subr.mxu0 %v285
        %v287 = vand.u32 %v233, 4294901760
        %288 = vmatpush1.msra.mxu0 %v287
        %v289 = vand.u32 %v236, 4294901760
        %290 = vmatprep.subr.mxu0 %v289
        %v291 = vand.u32 %v235, 4294901760
        %292 = vmatpush1.msra.mxu0 %v291
        %v293 = vand.u32 %v238, 4294901760
        %294 = vmatprep.subr.mxu0 %v293
        %v295 = vand.u32 %v237, 4294901760
        %296 = vmatpush1.msra.mxu0 %v295
        %v297 = vand.u32 %v240, 4294901760
        %298 = vmatprep.subr.mxu0 %v297
        %v299 = vand.u32 %v239, 4294901760
        %300 = vmatpush1.msra.mxu0 %v299
        %v301 = vand.u32 %v242, 4294901760
        %302 = vmatprep.subr.mxu0 %v301
        %v303 = vand.u32 %v241, 4294901760
        %304 = vmatpush1.msra.mxu0 %v303
        %v305 = vand.u32 %v244, 4294901760
        %306 = vmatprep.subr.mxu0 %v305
        %v307 = vand.u32 %v243, 4294901760
        %308 = vmatpush1.msra.mxu0 %v307
        %309 = vmatprep.subr.mxu0 0.0
        %310 = vmatpush1.msra.mxu0 0.0
        %311 = vmatprep.subr.mxu0 0.0
        %312 = vmatpush1.msra.mxu0 0.0
        %313 = vmatprep.subr.mxu0 0.0
        %314 = vmatpush1.msra.mxu0 0.0
        %315 = vmatprep.subr.mxu0 0.0
        %316 = vmatpush1.msra.mxu0 0.0
        %317 = vmatprep.subr.mxu0 0.0
        %318 = vmatpush1.msra.mxu0 0.0
        %319 = vmatprep.subr.mxu0 0.0
        %320 = vmatpush1.msra.mxu0 0.0
        %321 = vmatprep.subr.mxu0 0.0
        %322 = vmatpush1.msra.mxu0 0.0
        %323 = vmatprep.subr.mxu0 0.0
        %324 = vmatpush1.msra.mxu0 0.0
        %325 = vmatprep.subr.mxu0 0.0
        %326 = vmatpush1.msra.mxu0 0.0
        %327 = vmatprep.subr.mxu0 0.0
        %328 = vmatpush1.msra.mxu0 0.0
        %329 = vmatprep.subr.mxu0 0.0
        %330 = vmatpush1.msra.mxu0 0.0
        %331 = vmatprep.subr.mxu0 0.0
        %332 = vmatpush1.msra.mxu0 0.0
        %333 = vmatprep.subr.mxu0 0.0
        %334 = vmatpush1.msra.mxu0 0.0
        %335 = vmatprep.subr.mxu0 0.0
        %336 = vmatpush1.msra.mxu0 0.0
        %337 = vmatprep.subr.mxu0 0.0
        %338 = vmatpush1.msra.mxu0 0.0
        %339 = vmatprep.subr.mxu0 0.0
        %340 = vmatpush1.msra.mxu0 0.0
        %341 = vmatprep.mubr.f32.mxu0 0.0
        %v342 = vand.u32 %v197, 4294901760
        %v343 = vsub.f32 %v197, %v342
        %v344 = vand.u32 %v343, 4294901760
        %v345 = vsub.f32 %v343, %v344
        %v346 = vand.u32 %v345, 4294901760
        %347 = vmatmul.mubr.f32.gmra.mrb[0].mxu0 %v346
        %v348 = vpop.f32.mrb[0].mxu0
        %v349 = vadd.f32 0.0, %v348
        %v350 = vpop.f32.mrb[0].mxu0
        %v351 = vadd.f32 0.0, %v350
        %352 = vmatprep.mubr.f32.mxu0 0.0
        %v353 = vand.u32 %v198, 4294901760
        %v354 = vsub.f32 %v198, %v353
        %v355 = vand.u32 %v354, 4294901760
        %v356 = vsub.f32 %v354, %v355
        %v357 = vand.u32 %v356, 4294901760
        %358 = vmatmul.mubr.f32.gmra.mrb[0].mxu0 %v357
        %v359 = vpop.f32.mrb[0].mxu0
        %v360 = vadd.f32 0.0, %v359
        %v361 = vpop.f32.mrb[0].mxu0
        %v362 = vadd.f32 0.0, %v361
        %363 = vmatprep.mubr.f32.mxu0 0.0
        %v364 = vand.u32 %v199, 4294901760
        %v365 = vsub.f32 %v199, %v364
        %v366 = vand.u32 %v365, 4294901760
        %v367 = vsub.f32 %v365, %v366
        %v368 = vand.u32 %v367, 4294901760
        %369 = vmatmul.mubr.f32.gmra.mrb[0].mxu0 %v368
        %v370 = vpop.f32.mrb[0].mxu0
        %v371 = vadd.f32 0.0, %v370
        %v372 = vpop.f32.mrb[0].mxu0
        %v373 = vadd.f32 0.0, %v372
        %374 = vmatprep.mubr.f32.mxu0 0.0
        %v375 = vand.u32 %v200, 4294901760
        %v376 = vsub.f32 %v200, %v375
        %v377 = vand.u32 %v376, 4294901760
        %v378 = vsub.f32 %v376, %v377
        %v379 = vand.u32 %v378, 4294901760
        %380 = vmatmul.mubr.f32.gmra.mrb[0].mxu0 %v379
        %v381 = vpop.f32.mrb[0].mxu0
        %v382 = vadd.f32 0.0, %v381
        %v383 = vpop.f32.mrb[0].mxu0
        %v384 = vadd.f32 0.0, %v383
        %385 = vmatprep.mubr.f32.mxu0 0.0
        %v386 = vand.u32 %v201, 4294901760
        %v387 = vsub.f32 %v201, %v386
        %v388 = vand.u32 %v387, 4294901760
        %v389 = vsub.f32 %v387, %v388
        %v390 = vand.u32 %v389, 4294901760
        %391 = vmatmul.mubr.f32.gmra.mrb[0].mxu0 %v390
        %v392 = vpop.f32.mrb[0].mxu0
        %v393 = vadd.f32 0.0, %v392
        %v394 = vpop.f32.mrb[0].mxu0
        %v395 = vadd.f32 0.0, %v394
        %396 = vmatprep.mubr.f32.mxu0 0.0
        %v397 = vand.u32 %v202, 4294901760
        %v398 = vsub.f32 %v202, %v397
        %v399 = vand.u32 %v398, 4294901760
        %v400 = vsub.f32 %v398, %v399
        %v401 = vand.u32 %v400, 4294901760
        %402 = vmatmul.mubr.f32.gmra.mrb[0].mxu0 %v401
        %v403 = vpop.f32.mrb[0].mxu0
        %v404 = vadd.f32 0.0, %v403
        %v405 = vpop.f32.mrb[0].mxu0
        %v406 = vadd.f32 0.0, %v405
        %407 = vmatprep.mubr.f32.mxu0 0.0
        %v408 = vand.u32 %v203, 4294901760
        %v409 = vsub.f32 %v203, %v408
        %v410 = vand.u32 %v409, 4294901760
        %v411 = vsub.f32 %v409, %v410
        %v412 = vand.u32 %v411, 4294901760
        %413 = vmatmul.mubr.f32.gmra.mrb[0].mxu0 %v412
        %v414 = vpop.f32.mrb[0].mxu0
        %v415 = vadd.f32 0.0, %v414
        %v416 = vpop.f32.mrb[0].mxu0
        %v417 = vadd.f32 0.0, %v416
        %418 = vmatprep.mubr.f32.mxu0 0.0
        %v419 = vand.u32 %v204, 4294901760
        %v420 = vsub.f32 %v204, %v419
        %v421 = vand.u32 %v420, 4294901760
        %v422 = vsub.f32 %v420, %v421
        %v423 = vand.u32 %v422, 4294901760
        %424 = vmatmul.mubr.f32.gmra.mrb[0].mxu0 %v423
        %v425 = vpop.f32.mrb[0].mxu0
        %v426 = vadd.f32 0.0, %v425
        %v427 = vpop.f32.mrb[0].mxu0
        %v428 = vadd.f32 0.0, %v427
        %429 = vmatprep.mubr.f32.mxu0 0.0
        %v430 = vand.u32 %v205, 4294901760
        %v431 = vsub.f32 %v205, %v430
        %v432 = vand.u32 %v431, 4294901760
        %v433 = vsub.f32 %v431, %v432
        %v434 = vand.u32 %v433, 4294901760
        %435 = vmatmul.mubr.f32.gmra.mrb[0].mxu0 %v434
        %v436 = vpop.f32.mrb[0].mxu0
        %v437 = vadd.f32 0.0, %v436
        %v438 = vpop.f32.mrb[0].mxu0
        %v439 = vadd.f32 0.0, %v438
        %440 = vmatprep.mubr.f32.mxu0 0.0
        %v441 = vand.u32 %v206, 4294901760
        %v442 = vsub.f32 %v206, %v441
        %v443 = vand.u32 %v442, 4294901760
        %v444 = vsub.f32 %v442, %v443
        %v445 = vand.u32 %v444, 4294901760
        %446 = vmatmul.mubr.f32.gmra.mrb[0].mxu0 %v445
        %v447 = vpop.f32.mrb[0].mxu0
        %v448 = vadd.f32 0.0, %v447
        %v449 = vpop.f32.mrb[0].mxu0
        %v450 = vadd.f32 0.0, %v449
        %451 = vmatprep.mubr.f32.mxu0 0.0
        %v452 = vand.u32 %v207, 4294901760
        %v453 = vsub.f32 %v207, %v452
        %v454 = vand.u32 %v453, 4294901760
        %v455 = vsub.f32 %v453, %v454
        %v456 = vand.u32 %v455, 4294901760
        %457 = vmatmul.mubr.f32.gmra.mrb[0].mxu0 %v456
        %v458 = vpop.f32.mrb[0].mxu0
        %v459 = vadd.f32 0.0, %v458
        %v460 = vpop.f32.mrb[0].mxu0
        %v461 = vadd.f32 0.0, %v460
        %462 = vmatprep.mubr.f32.mxu0 0.0
        %v463 = vand.u32 %v208, 4294901760
        %v464 = vsub.f32 %v208, %v463
        %v465 = vand.u32 %v464, 4294901760
        %v466 = vsub.f32 %v464, %v465
        %v467 = vand.u32 %v466, 4294901760
        %468 = vmatmul.mubr.f32.gmra.mrb[0].mxu0 %v467
        %v469 = vpop.f32.mrb[0].mxu0
        %v470 = vadd.f32 0.0, %v469
        %v471 = vpop.f32.mrb[0].mxu0
        %v472 = vadd.f32 0.0, %v471
        %473 = vmatprep.mubr.f32.mxu0 0.0
        %v474 = vand.u32 %v209, 4294901760
        %v475 = vsub.f32 %v209, %v474
        %v476 = vand.u32 %v475, 4294901760
        %v477 = vsub.f32 %v475, %v476
        %v478 = vand.u32 %v477, 4294901760
        %479 = vmatmul.mubr.f32.gmra.mrb[0].mxu0 %v478
        %v480 = vpop.f32.mrb[0].mxu0
        %v481 = vadd.f32 0.0, %v480
        %v482 = vpop.f32.mrb[0].mxu0
        %v483 = vadd.f32 0.0, %v482
        %484 = vmatprep.mubr.f32.mxu0 0.0
        %v485 = vand.u32 %v210, 4294901760
        %v486 = vsub.f32 %v210, %v485
        %v487 = vand.u32 %v486, 4294901760
        %v488 = vsub.f32 %v486, %v487
        %v489 = vand.u32 %v488, 4294901760
        %490 = vmatmul.mubr.f32.gmra.mrb[0].mxu0 %v489
        %v491 = vpop.f32.mrb[0].mxu0
        %v492 = vadd.f32 0.0, %v491
        %v493 = vpop.f32.mrb[0].mxu0
        %v494 = vadd.f32 0.0, %v493
        %495 = vmatprep.mubr.f32.mxu0 0.0
        %v496 = vand.u32 %v211, 4294901760
        %v497 = vsub.f32 %v211, %v496
        %v498 = vand.u32 %v497, 4294901760
        %v499 = vsub.f32 %v497, %v498
        %v500 = vand.u32 %v499, 4294901760
        %501 = vmatmul.mubr.f32.gmra.mrb[0].mxu0 %v500
        %v502 = vpop.f32.mrb[0].mxu0
        %v503 = vadd.f32 0.0, %v502
        %v504 = vpop.f32.mrb[0].mxu0
        %v505 = vadd.f32 0.0, %v504
        %506 = vmatprep.mubr.f32.mxu0 0.0
        %v507 = vand.u32 %v212, 4294901760
        %v508 = vsub.f32 %v212, %v507
        %v509 = vand.u32 %v508, 4294901760
        %v510 = vsub.f32 %v508, %v509
        %v511 = vand.u32 %v510, 4294901760
        %512 = vmatmul.mubr.f32.gmra.mrb[0].mxu0 %v511
        %v513 = vpop.f32.mrb[0].mxu0
        %v514 = vadd.f32 0.0, %v513
        %v515 = vpop.f32.mrb[0].mxu0
        %v516 = vadd.f32 0.0, %v515
        %517 = vdwg.mxu0
        %v518 = vand.u32 %v214, 4294901760
        %v519 = vsub.f32 %v214, %v518
        %v520 = vand.u32 %v519, 4294901760
        %v521 = vsub.f32 %v519, %v520
        %v522 = vand.u32 %v521, 4294901760
        %523 = vmatprep.subr.mxu0 %v522
        %v524 = vand.u32 %v213, 4294901760
        %v525 = vsub.f32 %v213, %v524
        %v526 = vand.u32 %v525, 4294901760
        %v527 = vsub.f32 %v525, %v526
        %v528 = vand.u32 %v527, 4294901760
        %529 = vmatpush1.msra.mxu0 %v528
        %v530 = vand.u32 %v216, 4294901760
        %v531 = vsub.f32 %v216, %v530
        %v532 = vand.u32 %v531, 4294901760
        %v533 = vsub.f32 %v531, %v532
        %v534 = vand.u32 %v533, 4294901760
        %535 = vmatprep.subr.mxu0 %v534
        %v536 = vand.u32 %v215, 4294901760
        %v537 = vsub.f32 %v215, %v536
        %v538 = vand.u32 %v537, 4294901760
        %v539 = vsub.f32 %v537, %v538
        %v540 = vand.u32 %v539, 4294901760
        %541 = vmatpush1.msra.mxu0 %v540
        %v542 = vand.u32 %v218, 4294901760
        %v543 = vsub.f32 %v218, %v542
        %v544 = vand.u32 %v543, 4294901760
        %v545 = vsub.f32 %v543, %v544
        %v546 = vand.u32 %v545, 4294901760
        %547 = vmatprep.subr.mxu0 %v546
        %v548 = vand.u32 %v217, 4294901760
        %v549 = vsub.f32 %v217, %v548
        %v550 = vand.u32 %v549, 4294901760
        %v551 = vsub.f32 %v549, %v550
        %v552 = vand.u32 %v551, 4294901760
        %553 = vmatpush1.msra.mxu0 %v552
        %v554 = vand.u32 %v220, 4294901760
        %v555 = vsub.f32 %v220, %v554
        %v556 = vand.u32 %v555, 4294901760
        %v557 = vsub.f32 %v555, %v556
        %v558 = vand.u32 %v557, 4294901760
        %559 = vmatprep.subr.mxu0 %v558
        %v560 = vand.u32 %v219, 4294901760
        %v561 = vsub.f32 %v219, %v560
        %v562 = vand.u32 %v561, 4294901760
        %v563 = vsub.f32 %v561, %v562
        %v564 = vand.u32 %v563, 4294901760
        %565 = vmatpush1.msra.mxu0 %v564
        %v566 = vand.u32 %v222, 4294901760
        %v567 = vsub.f32 %v222, %v566
        %v568 = vand.u32 %v567, 4294901760
        %v569 = vsub.f32 %v567, %v568
        %v570 = vand.u32 %v569, 4294901760
        %571 = vmatprep.subr.mxu0 %v570
        %v572 = vand.u32 %v221, 4294901760
        %v573 = vsub.f32 %v221, %v572
        %v574 = vand.u32 %v573, 4294901760
        %v575 = vsub.f32 %v573, %v574
        %v576 = vand.u32 %v575, 4294901760
        %577 = vmatpush1.msra.mxu0 %v576
        %v578 = vand.u32 %v224, 4294901760
        %v579 = vsub.f32 %v224, %v578
        %v580 = vand.u32 %v579, 4294901760
        %v581 = vsub.f32 %v579, %v580
        %v582 = vand.u32 %v581, 4294901760
        %583 = vmatprep.subr.mxu0 %v582
        %v584 = vand.u32 %v223, 4294901760
        %v585 = vsub.f32 %v223, %v584
        %v586 = vand.u32 %v585, 4294901760
        %v587 = vsub.f32 %v585, %v586
        %v588 = vand.u32 %v587, 4294901760
        %589 = vmatpush1.msra.mxu0 %v588
        %v590 = vand.u32 %v226, 4294901760
        %v591 = vsub.f32 %v226, %v590
        %v592 = vand.u32 %v591, 4294901760
        %v593 = vsub.f32 %v591, %v592
        %v594 = vand.u32 %v593, 4294901760
        %595 = vmatprep.subr.mxu0 %v594
        %v596 = vand.u32 %v225, 4294901760
        %v597 = vsub.f32 %v225, %v596
        %v598 = vand.u32 %v597, 4294901760
        %v599 = vsub.f32 %v597, %v598
        %v600 = vand.u32 %v599, 4294901760
        %601 = vmatpush1.msra.mxu0 %v600
        %v602 = vand.u32 %v228, 4294901760
        %v603 = vsub.f32 %v228, %v602
        %v604 = vand.u32 %v603, 4294901760
        %v605 = vsub.f32 %v603, %v604
        %v606 = vand.u32 %v605, 4294901760
        %607 = vmatprep.subr.mxu0 %v606
        %v608 = vand.u32 %v227, 4294901760
        %v609 = vsub.f32 %v227, %v608
        %v610 = vand.u32 %v609, 4294901760
        %v611 = vsub.f32 %v609, %v610
        %v612 = vand.u32 %v611, 4294901760
        %613 = vmatpush1.msra.mxu0 %v612
        %v614 = vand.u32 %v230, 4294901760
        %v615 = vsub.f32 %v230, %v614
        %v616 = vand.u32 %v615, 4294901760
        %v617 = vsub.f32 %v615, %v616
        %v618 = vand.u32 %v617, 4294901760
        %619 = vmatprep.subr.mxu0 %v618
        %v620 = vand.u32 %v229, 4294901760
        %v621 = vsub.f32 %v229, %v620
        %v622 = vand.u32 %v621, 4294901760
        %v623 = vsub.f32 %v621, %v622
        %v624 = vand.u32 %v623, 4294901760
        %625 = vmatpush1.msra.mxu0 %v624
        %v626 = vand.u32 %v232, 4294901760
        %v627 = vsub.f32 %v232, %v626
        %v628 = vand.u32 %v627, 4294901760
        %v629 = vsub.f32 %v627, %v628
        %v630 = vand.u32 %v629, 4294901760
        %631 = vmatprep.subr.mxu0 %v630
        %v632 = vand.u32 %v231, 4294901760
        %v633 = vsub.f32 %v231, %v632
        %v634 = vand.u32 %v633, 4294901760
        %v635 = vsub.f32 %v633, %v634
        %v636 = vand.u32 %v635, 4294901760
        %637 = vmatpush1.msra.mxu0 %v636
        %v638 = vand.u32 %v234, 4294901760
        %v639 = vsub.f32 %v234, %v638
        %v640 = vand.u32 %v639, 4294901760
        %v641 = vsub.f32 %v639, %v640
        %v642 = vand.u32 %v641, 4294901760
        %643 = vmatprep.subr.mxu0 %v642
        %v644 = vand.u32 %v233, 4294901760
        %v645 = vsub.f32 %v233, %v644
        %v646 = vand.u32 %v645, 4294901760
        %v647 = vsub.f32 %v645, %v646
        %v648 = vand.u32 %v647, 4294901760
        %649 = vmatpush1.msra.mxu0 %v648
        %v650 = vand.u32 %v236, 4294901760
        %v651 = vsub.f32 %v236, %v650
        %v652 = vand.u32 %v651, 4294901760
        %v653 = vsub.f32 %v651, %v652
        %v654 = vand.u32 %v653, 4294901760
        %655 = vmatprep.subr.mxu0 %v654
        %v656 = vand.u32 %v235, 4294901760
        %v657 = vsub.f32 %v235, %v656
        %v658 = vand.u32 %v657, 4294901760
        %v659 = vsub.f32 %v657, %v658
        %v660 = vand.u32 %v659, 4294901760
        %661 = vmatpush1.msra.mxu0 %v660
        %v662 = vand.u32 %v238, 4294901760
        %v663 = vsub.f32 %v238, %v662
        %v664 = vand.u32 %v663, 4294901760
        %v665 = vsub.f32 %v663, %v664
        %v666 = vand.u32 %v665, 4294901760
        %667 = vmatprep.subr.mxu0 %v666
        %v668 = vand.u32 %v237, 4294901760
        %v669 = vsub.f32 %v237, %v668
        %v670 = vand.u32 %v669, 4294901760
        %v671 = vsub.f32 %v669, %v670
        %v672 = vand.u32 %v671, 4294901760
        %673 = vmatpush1.msra.mxu0 %v672
        %v674 = vand.u32 %v240, 4294901760
        %v675 = vsub.f32 %v240, %v674
        %v676 = vand.u32 %v675, 4294901760
        %v677 = vsub.f32 %v675, %v676
        %v678 = vand.u32 %v677, 4294901760
        %679 = vmatprep.subr.mxu0 %v678
        %v680 = vand.u32 %v239, 4294901760
        %v681 = vsub.f32 %v239, %v680
        %v682 = vand.u32 %v681, 4294901760
        %v683 = vsub.f32 %v681, %v682
        %v684 = vand.u32 %v683, 4294901760
        %685 = vmatpush1.msra.mxu0 %v684
        %v686 = vand.u32 %v242, 4294901760
        %v687 = vsub.f32 %v242, %v686
        %v688 = vand.u32 %v687, 4294901760
        %v689 = vsub.f32 %v687, %v688
        %v690 = vand.u32 %v689, 4294901760
        %691 = vmatprep.subr.mxu0 %v690
        %v692 = vand.u32 %v241, 4294901760
        %v693 = vsub.f32 %v241, %v692
        %v694 = vand.u32 %v693, 4294901760
        %v695 = vsub.f32 %v693, %v694
        %v696 = vand.u32 %v695, 4294901760
        %697 = vmatpush1.msra.mxu0 %v696
        %v698 = vand.u32 %v244, 4294901760
        %v699 = vsub.f32 %v244, %v698
        %v700 = vand.u32 %v699, 4294901760
        %v701 = vsub.f32 %v699, %v700
        %v702 = vand.u32 %v701, 4294901760
        %703 = vmatprep.subr.mxu0 %v702
        %v704 = vand.u32 %v243, 4294901760
        %v705 = vsub.f32 %v243, %v704
        %v706 = vand.u32 %v705, 4294901760
        %v707 = vsub.f32 %v705, %v706
        %v708 = vand.u32 %v707, 4294901760
        %709 = vmatpush1.msra.mxu0 %v708
        %710 = vmatprep.subr.mxu0 0.0
        %711 = vmatpush1.msra.mxu0 0.0
        %712 = vmatprep.subr.mxu0 0.0
        %713 = vmatpush1.msra.mxu0 0.0
        %714 = vmatprep.subr.mxu0 0.0
        %715 = vmatpush1.msra.mxu0 0.0
        %716 = vmatprep.subr.mxu0 0.0
        %717 = vmatpush1.msra.mxu0 0.0
        %718 = vmatprep.subr.mxu0 0.0
        %719 = vmatpush1.msra.mxu0 0.0
        %720 = vmatprep.subr.mxu0 0.0
        %721 = vmatpush1.msra.mxu0 0.0
        %722 = vmatprep.subr.mxu0 0.0
        %723 = vmatpush1.msra.mxu0 0.0
        %724 = vmatprep.subr.mxu0 0.0
        %725 = vmatpush1.msra.mxu0 0.0
        %726 = vmatprep.subr.mxu0 0.0
        %727 = vmatpush1.msra.mxu0 0.0
        %728 = vmatprep.subr.mxu0 0.0
        %729 = vmatpush1.msra.mxu0 0.0
        %730 = vmatprep.subr.mxu0 0.0
        %731 = vmatpush1.msra.mxu0 0.0
        %732 = vmatprep.subr.mxu0 0.0
        %733 = vmatpush1.msra.mxu0 0.0
        %734 = vmatprep.subr.mxu0 0.0
        %735 = vmatpush1.msra.mxu0 0.0
        %736 = vmatprep.subr.mxu0 0.0
        %737 = vmatpush1.msra.mxu0 0.0
        %738 = vmatprep.subr.mxu0 0.0
        %739 = vmatpush1.msra.mxu0 0.0
        %740 = vmatprep.subr.mxu0 0.0
        %741 = vmatpush1.msra.mxu0 0.0
        %742 = vmatprep.mubr.f32.mxu0 0.0
        %v743 = vand.u32 %v197, 4294901760
        %744 = vmatmul.mubr.f32.gmra.mrb[0].mxu0 %v743
        %v745 = vpop.f32.mrb[0].mxu0
        %v746 = vadd.f32 %v349, %v745
        %v747 = vpop.f32.mrb[0].mxu0
        %v748 = vadd.f32 %v351, %v747
        %749 = vmatprep.mubr.f32.mxu0 0.0
        %v750 = vand.u32 %v198, 4294901760
        %751 = vmatmul.mubr.f32.gmra.mrb[0].mxu0 %v750
        %v752 = vpop.f32.mrb[0].mxu0
        %v753 = vadd.f32 %v360, %v752
        %v754 = vpop.f32.mrb[0].mxu0
        %v755 = vadd.f32 %v362, %v754
        %756 = vmatprep.mubr.f32.mxu0 0.0
        %v757 = vand.u32 %v199, 4294901760
        %758 = vmatmul.mubr.f32.gmra.mrb[0].mxu0 %v757
        %v759 = vpop.f32.mrb[0].mxu0
        %v760 = vadd.f32 %v371, %v759
        %v761 = vpop.f32.mrb[0].mxu0
        %v762 = vadd.f32 %v373, %v761
        %763 = vmatprep.mubr.f32.mxu0 0.0
        %v764 = vand.u32 %v200, 4294901760
        %765 = vmatmul.mubr.f32.gmra.mrb[0].mxu0 %v764
        %v766 = vpop.f32.mrb[0].mxu0
        %v767 = vadd.f32 %v382, %v766
        %v768 = vpop.f32.mrb[0].mxu0
        %v769 = vadd.f32 %v384, %v768
        %770 = vmatprep.mubr.f32.mxu0 0.0
        %v771 = vand.u32 %v201, 4294901760
        %772 = vmatmul.mubr.f32.gmra.mrb[0].mxu0 %v771
        %v773 = vpop.f32.mrb[0].mxu0
        %v774 = vadd.f32 %v393, %v773
        %v775 = vpop.f32.mrb[0].mxu0
        %v776 = vadd.f32 %v395, %v775
        %777 = vmatprep.mubr.f32.mxu0 0.0
        %v778 = vand.u32 %v202, 4294901760
        %779 = vmatmul.mubr.f32.gmra.mrb[0].mxu0 %v778
        %v780 = vpop.f32.mrb[0].mxu0
        %v781 = vadd.f32 %v404, %v780
        %v782 = vpop.f32.mrb[0].mxu0
        %v783 = vadd.f32 %v406, %v782
        %784 = vmatprep.mubr.f32.mxu0 0.0
        %v785 = vand.u32 %v203, 4294901760
        %786 = vmatmul.mubr.f32.gmra.mrb[0].mxu0 %v785
        %v787 = vpop.f32.mrb[0].mxu0
        %v788 = vadd.f32 %v415, %v787
        %v789 = vpop.f32.mrb[0].mxu0
        %v790 = vadd.f32 %v417, %v789
        %791 = vmatprep.mubr.f32.mxu0 0.0
        %v792 = vand.u32 %v204, 4294901760
        %793 = vmatmul.mubr.f32.gmra.mrb[0].mxu0 %v792
        %v794 = vpop.f32.mrb[0].mxu0
        %v795 = vadd.f32 %v426, %v794
        %v796 = vpop.f32.mrb[0].mxu0
        %v797 = vadd.f32 %v428, %v796
        %798 = vmatprep.mubr.f32.mxu0 0.0
        %v799 = vand.u32 %v205, 4294901760
        %800 = vmatmul.mubr.f32.gmra.mrb[0].mxu0 %v799
        %v801 = vpop.f32.mrb[0].mxu0
        %v802 = vadd.f32 %v437, %v801
        %v803 = vpop.f32.mrb[0].mxu0
        %v804 = vadd.f32 %v439, %v803
        %805 = vmatprep.mubr.f32.mxu0 0.0
        %v806 = vand.u32 %v206, 4294901760
        %807 = vmatmul.mubr.f32.gmra.mrb[0].mxu0 %v806
        %v808 = vpop.f32.mrb[0].mxu0
        %v809 = vadd.f32 %v448, %v808
        %v810 = vpop.f32.mrb[0].mxu0
        %v811 = vadd.f32 %v450, %v810
        %812 = vmatprep.mubr.f32.mxu0 0.0
        %v813 = vand.u32 %v207, 4294901760
        %814 = vmatmul.mubr.f32.gmra.mrb[0].mxu0 %v813
        %v815 = vpop.f32.mrb[0].mxu0
        %v816 = vadd.f32 %v459, %v815
        %v817 = vpop.f32.mrb[0].mxu0
        %v818 = vadd.f32 %v461, %v817
        %819 = vmatprep.mubr.f32.mxu0 0.0
        %v820 = vand.u32 %v208, 4294901760
        %821 = vmatmul.mubr.f32.gmra.mrb[0].mxu0 %v820
        %v822 = vpop.f32.mrb[0].mxu0
        %v823 = vadd.f32 %v470, %v822
        %v824 = vpop.f32.mrb[0].mxu0
        %v825 = vadd.f32 %v472, %v824
        %826 = vmatprep.mubr.f32.mxu0 0.0
        %v827 = vand.u32 %v209, 4294901760
        %828 = vmatmul.mubr.f32.gmra.mrb[0].mxu0 %v827
        %v829 = vpop.f32.mrb[0].mxu0
        %v830 = vadd.f32 %v481, %v829
        %v831 = vpop.f32.mrb[0].mxu0
        %v832 = vadd.f32 %v483, %v831
        %833 = vmatprep.mubr.f32.mxu0 0.0
        %v834 = vand.u32 %v210, 4294901760
        %835 = vmatmul.mubr.f32.gmra.mrb[0].mxu0 %v834
        %v836 = vpop.f32.mrb[0].mxu0
        %v837 = vadd.f32 %v492, %v836
        %v838 = vpop.f32.mrb[0].mxu0
        %v839 = vadd.f32 %v494, %v838
        %840 = vmatprep.mubr.f32.mxu0 0.0
        %v841 = vand.u32 %v211, 4294901760
        %842 = vmatmul.mubr.f32.gmra.mrb[0].mxu0 %v841
        %v843 = vpop.f32.mrb[0].mxu0
        %v844 = vadd.f32 %v503, %v843
        %v845 = vpop.f32.mrb[0].mxu0
        %v846 = vadd.f32 %v505, %v845
        %847 = vmatprep.mubr.f32.mxu0 0.0
        %v848 = vand.u32 %v212, 4294901760
        %849 = vmatmul.mubr.f32.gmra.mrb[0].mxu0 %v848
        %v850 = vpop.f32.mrb[0].mxu0
        %v851 = vadd.f32 %v514, %v850
        %v852 = vpop.f32.mrb[0].mxu0
        %v853 = vadd.f32 %v516, %v852
        %854 = vdwg.mxu0
        %v855 = vand.u32 %v214, 4294901760
        %v856 = vsub.f32 %v214, %v855
        %857 = vmatprep.subr.mxu0 %v856
        %v858 = vand.u32 %v213, 4294901760
        %v859 = vsub.f32 %v213, %v858
        %860 = vmatpush1.msra.mxu0 %v859
        %v861 = vand.u32 %v216, 4294901760
        %v862 = vsub.f32 %v216, %v861
        %863 = vmatprep.subr.mxu0 %v862
        %v864 = vand.u32 %v215, 4294901760
        %v865 = vsub.f32 %v215, %v864
        %866 = vmatpush1.msra.mxu0 %v865
        %v867 = vand.u32 %v218, 4294901760
        %v868 = vsub.f32 %v218, %v867
        %869 = vmatprep.subr.mxu0 %v868
        %v870 = vand.u32 %v217, 4294901760
        %v871 = vsub.f32 %v217, %v870
        %872 = vmatpush1.msra.mxu0 %v871
        %v873 = vand.u32 %v220, 4294901760
        %v874 = vsub.f32 %v220, %v873
        %875 = vmatprep.subr.mxu0 %v874
        %v876 = vand.u32 %v219, 4294901760
        %v877 = vsub.f32 %v219, %v876
        %878 = vmatpush1.msra.mxu0 %v877
        %v879 = vand.u32 %v222, 4294901760
        %v880 = vsub.f32 %v222, %v879
        %881 = vmatprep.subr.mxu0 %v880
        %v882 = vand.u32 %v221, 4294901760
        %v883 = vsub.f32 %v221, %v882
        %884 = vmatpush1.msra.mxu0 %v883
        %v885 = vand.u32 %v224, 4294901760
        %v886 = vsub.f32 %v224, %v885
        %887 = vmatprep.subr.mxu0 %v886
        %v888 = vand.u32 %v223, 4294901760
        %v889 = vsub.f32 %v223, %v888
        %890 = vmatpush1.msra.mxu0 %v889
        %v891 = vand.u32 %v226, 4294901760
        %v892 = vsub.f32 %v226, %v891
        %893 = vmatprep.subr.mxu0 %v892
        %v894 = vand.u32 %v225, 4294901760
        %v895 = vsub.f32 %v225, %v894
        %896 = vmatpush1.msra.mxu0 %v895
        %v897 = vand.u32 %v228, 4294901760
        %v898 = vsub.f32 %v228, %v897
        %899 = vmatprep.subr.mxu0 %v898
        %v900 = vand.u32 %v227, 4294901760
        %v901 = vsub.f32 %v227, %v900
        %902 = vmatpush1.msra.mxu0 %v901
        %v903 = vand.u32 %v230, 4294901760
        %v904 = vsub.f32 %v230, %v903
        %905 = vmatprep.subr.mxu0 %v904
        %v906 = vand.u32 %v229, 4294901760
        %v907 = vsub.f32 %v229, %v906
        %908 = vmatpush1.msra.mxu0 %v907
        %v909 = vand.u32 %v232, 4294901760
        %v910 = vsub.f32 %v232, %v909
        %911 = vmatprep.subr.mxu0 %v910
        %v912 = vand.u32 %v231, 4294901760
        %v913 = vsub.f32 %v231, %v912
        %914 = vmatpush1.msra.mxu0 %v913
        %v915 = vand.u32 %v234, 4294901760
        %v916 = vsub.f32 %v234, %v915
        %917 = vmatprep.subr.mxu0 %v916
        %v918 = vand.u32 %v233, 4294901760
        %v919 = vsub.f32 %v233, %v918
        %920 = vmatpush1.msra.mxu0 %v919
        %v921 = vand.u32 %v236, 4294901760
        %v922 = vsub.f32 %v236, %v921
        %923 = vmatprep.subr.mxu0 %v922
        %v924 = vand.u32 %v235, 4294901760
        %v925 = vsub.f32 %v235, %v924
        %926 = vmatpush1.msra.mxu0 %v925
        %v927 = vand.u32 %v238, 4294901760
        %v928 = vsub.f32 %v238, %v927
        %929 = vmatprep.subr.mxu0 %v928
        %v930 = vand.u32 %v237, 4294901760
        %v931 = vsub.f32 %v237, %v930
        %932 = vmatpush1.msra.mxu0 %v931
        %v933 = vand.u32 %v240, 4294901760
        %v934 = vsub.f32 %v240, %v933
        %935 = vmatprep.subr.mxu0 %v934
        %v936 = vand.u32 %v239, 4294901760
        %v937 = vsub.f32 %v239, %v936
        %938 = vmatpush1.msra.mxu0 %v937
        %v939 = vand.u32 %v242, 4294901760
        %v940 = vsub.f32 %v242, %v939
        %941 = vmatprep.subr.mxu0 %v940
        %v942 = vand.u32 %v241, 4294901760
        %v943 = vsub.f32 %v241, %v942
        %944 = vmatpush1.msra.mxu0 %v943
        %v945 = vand.u32 %v244, 4294901760
        %v946 = vsub.f32 %v244, %v945
        %947 = vmatprep.subr.mxu0 %v946
        %v948 = vand.u32 %v243, 4294901760
        %v949 = vsub.f32 %v243, %v948
        %950 = vmatpush1.msra.mxu0 %v949
        %951 = vmatprep.subr.mxu0 0.0
        %952 = vmatpush1.msra.mxu0 0.0
        %953 = vmatprep.subr.mxu0 0.0
        %954 = vmatpush1.msra.mxu0 0.0
        %955 = vmatprep.subr.mxu0 0.0
        %956 = vmatpush1.msra.mxu0 0.0
        %957 = vmatprep.subr.mxu0 0.0
        %958 = vmatpush1.msra.mxu0 0.0
        %959 = vmatprep.subr.mxu0 0.0
        %960 = vmatpush1.msra.mxu0 0.0
        %961 = vmatprep.subr.mxu0 0.0
        %962 = vmatpush1.msra.mxu0 0.0
        %963 = vmatprep.subr.mxu0 0.0
        %964 = vmatpush1.msra.mxu0 0.0
        %965 = vmatprep.subr.mxu0 0.0
        %966 = vmatpush1.msra.mxu0 0.0
        %967 = vmatprep.subr.mxu0 0.0
        %968 = vmatpush1.msra.mxu0 0.0
        %969 = vmatprep.subr.mxu0 0.0
        %970 = vmatpush1.msra.mxu0 0.0
        %971 = vmatprep.subr.mxu0 0.0
        %972 = vmatpush1.msra.mxu0 0.0
        %973 = vmatprep.subr.mxu0 0.0
        %974 = vmatpush1.msra.mxu0 0.0
        %975 = vmatprep.subr.mxu0 0.0
        %976 = vmatpush1.msra.mxu0 0.0
        %977 = vmatprep.subr.mxu0 0.0
        %978 = vmatpush1.msra.mxu0 0.0
        %979 = vmatprep.subr.mxu0 0.0
        %980 = vmatpush1.msra.mxu0 0.0
        %981 = vmatprep.subr.mxu0 0.0
        %982 = vmatpush1.msra.mxu0 0.0
        %983 = vmatprep.mubr.f32.mxu0 0.0
        %v984 = vand.u32 %v197, 4294901760
        %v985 = vsub.f32 %v197, %v984
        %986 = vmatmul.mubr.f32.gmra.mrb[0].mxu0 %v985
        %v987 = vpop.f32.mrb[0].mxu0
        %v988 = vadd.f32 %v746, %v987
        %v989 = vpop.f32.mrb[0].mxu0
        %v990 = vadd.f32 %v748, %v989
        %991 = vmatprep.mubr.f32.mxu0 0.0
        %v992 = vand.u32 %v198, 4294901760
        %v993 = vsub.f32 %v198, %v992
        %994 = vmatmul.mubr.f32.gmra.mrb[0].mxu0 %v993
        %v995 = vpop.f32.mrb[0].mxu0
        %v996 = vadd.f32 %v753, %v995
        %v997 = vpop.f32.mrb[0].mxu0
        %v998 = vadd.f32 %v755, %v997
        %999 = vmatprep.mubr.f32.mxu0 0.0
        %v1000 = vand.u32 %v199, 4294901760
        %v1001 = vsub.f32 %v199, %v1000
        %1002 = vmatmul.mubr.f32.gmra.mrb[0].mxu0 %v1001
        %v1003 = vpop.f32.mrb[0].mxu0
        %v1004 = vadd.f32 %v760, %v1003
        %v1005 = vpop.f32.mrb[0].mxu0
        %v1006 = vadd.f32 %v762, %v1005
        %1007 = vmatprep.mubr.f32.mxu0 0.0
        %v1008 = vand.u32 %v200, 4294901760
        %v1009 = vsub.f32 %v200, %v1008
        %1010 = vmatmul.mubr.f32.gmra.mrb[0].mxu0 %v1009
        %v1011 = vpop.f32.mrb[0].mxu0
        %v1012 = vadd.f32 %v767, %v1011
        %v1013 = vpop.f32.mrb[0].mxu0
        %v1014 = vadd.f32 %v769, %v1013
        %1015 = vmatprep.mubr.f32.mxu0 0.0
        %v1016 = vand.u32 %v201, 4294901760
        %v1017 = vsub.f32 %v201, %v1016
        %1018 = vmatmul.mubr.f32.gmra.mrb[0].mxu0 %v1017
        %v1019 = vpop.f32.mrb[0].mxu0
        %v1020 = vadd.f32 %v774, %v1019
        %v1021 = vpop.f32.mrb[0].mxu0
        %v1022 = vadd.f32 %v776, %v1021
        %1023 = vmatprep.mubr.f32.mxu0 0.0
        %v1024 = vand.u32 %v202, 4294901760
        %v1025 = vsub.f32 %v202, %v1024
        %1026 = vmatmul.mubr.f32.gmra.mrb[0].mxu0 %v1025
        %v1027 = vpop.f32.mrb[0].mxu0
        %v1028 = vadd.f32 %v781, %v1027
        %v1029 = vpop.f32.mrb[0].mxu0
        %v1030 = vadd.f32 %v783, %v1029
        %1031 = vmatprep.mubr.f32.mxu0 0.0
        %v1032 = vand.u32 %v203, 4294901760
        %v1033 = vsub.f32 %v203, %v1032
        %1034 = vmatmul.mubr.f32.gmra.mrb[0].mxu0 %v1033
        %v1035 = vpop.f32.mrb[0].mxu0
        %v1036 = vadd.f32 %v788, %v1035
        %v1037 = vpop.f32.mrb[0].mxu0
        %v1038 = vadd.f32 %v790, %v1037
        %1039 = vmatprep.mubr.f32.mxu0 0.0
        %v1040 = vand.u32 %v204, 4294901760
        %v1041 = vsub.f32 %v204, %v1040
        %1042 = vmatmul.mubr.f32.gmra.mrb[0].mxu0 %v1041
        %v1043 = vpop.f32.mrb[0].mxu0
        %v1044 = vadd.f32 %v795, %v1043
        %v1045 = vpop.f32.mrb[0].mxu0
        %v1046 = vadd.f32 %v797, %v1045
        %1047 = vmatprep.mubr.f32.mxu0 0.0
        %v1048 = vand.u32 %v205, 4294901760
        %v1049 = vsub.f32 %v205, %v1048
        %1050 = vmatmul.mubr.f32.gmra.mrb[0].mxu0 %v1049
        %v1051 = vpop.f32.mrb[0].mxu0
        %v1052 = vadd.f32 %v802, %v1051
        %v1053 = vpop.f32.mrb[0].mxu0
        %v1054 = vadd.f32 %v804, %v1053
        %1055 = vmatprep.mubr.f32.mxu0 0.0
        %v1056 = vand.u32 %v206, 4294901760
        %v1057 = vsub.f32 %v206, %v1056
        %1058 = vmatmul.mubr.f32.gmra.mrb[0].mxu0 %v1057
        %v1059 = vpop.f32.mrb[0].mxu0
        %v1060 = vadd.f32 %v809, %v1059
        %v1061 = vpop.f32.mrb[0].mxu0
        %v1062 = vadd.f32 %v811, %v1061
        %1063 = vmatprep.mubr.f32.mxu0 0.0
        %v1064 = vand.u32 %v207, 4294901760
        %v1065 = vsub.f32 %v207, %v1064
        %1066 = vmatmul.mubr.f32.gmra.mrb[0].mxu0 %v1065
        %v1067 = vpop.f32.mrb[0].mxu0
        %v1068 = vadd.f32 %v816, %v1067
        %v1069 = vpop.f32.mrb[0].mxu0
        %v1070 = vadd.f32 %v818, %v1069
        %1071 = vmatprep.mubr.f32.mxu0 0.0
        %v1072 = vand.u32 %v208, 4294901760
        %v1073 = vsub.f32 %v208, %v1072
        %1074 = vmatmul.mubr.f32.gmra.mrb[0].mxu0 %v1073
        %v1075 = vpop.f32.mrb[0].mxu0
        %v1076 = vadd.f32 %v823, %v1075
        %v1077 = vpop.f32.mrb[0].mxu0
        %v1078 = vadd.f32 %v825, %v1077
        %1079 = vmatprep.mubr.f32.mxu0 0.0
        %v1080 = vand.u32 %v209, 4294901760
        %v1081 = vsub.f32 %v209, %v1080
        %1082 = vmatmul.mubr.f32.gmra.mrb[0].mxu0 %v1081
        %v1083 = vpop.f32.mrb[0].mxu0
        %v1084 = vadd.f32 %v830, %v1083
        %v1085 = vpop.f32.mrb[0].mxu0
        %v1086 = vadd.f32 %v832, %v1085
        %1087 = vmatprep.mubr.f32.mxu0 0.0
        %v1088 = vand.u32 %v210, 4294901760
        %v1089 = vsub.f32 %v210, %v1088
        %1090 = vmatmul.mubr.f32.gmra.mrb[0].mxu0 %v1089
        %v1091 = vpop.f32.mrb[0].mxu0
        %v1092 = vadd.f32 %v837, %v1091
        %v1093 = vpop.f32.mrb[0].mxu0
        %v1094 = vadd.f32 %v839, %v1093
        %1095 = vmatprep.mubr.f32.mxu0 0.0
        %v1096 = vand.u32 %v211, 4294901760
        %v1097 = vsub.f32 %v211, %v1096
        %1098 = vmatmul.mubr.f32.gmra.mrb[0].mxu0 %v1097
        %v1099 = vpop.f32.mrb[0].mxu0
        %v1100 = vadd.f32 %v844, %v1099
        %v1101 = vpop.f32.mrb[0].mxu0
        %v1102 = vadd.f32 %v846, %v1101
        %1103 = vmatprep.mubr.f32.mxu0 0.0
        %v1104 = vand.u32 %v212, 4294901760
        %v1105 = vsub.f32 %v212, %v1104
        %1106 = vmatmul.mubr.f32.gmra.mrb[0].mxu0 %v1105
        %v1107 = vpop.f32.mrb[0].mxu0
        %v1108 = vadd.f32 %v851, %v1107
        %v1109 = vpop.f32.mrb[0].mxu0
        %v1110 = vadd.f32 %v853, %v1109
        %1111 = vdwg.mxu0
        %v1112 = vand.u32 %v214, 4294901760
        %1113 = vmatprep.subr.mxu0 %v1112
        %v1114 = vand.u32 %v213, 4294901760
        %1115 = vmatpush1.msra.mxu0 %v1114
        %v1116 = vand.u32 %v216, 4294901760
        %1117 = vmatprep.subr.mxu0 %v1116
        %v1118 = vand.u32 %v215, 4294901760
        %1119 = vmatpush1.msra.mxu0 %v1118
        %v1120 = vand.u32 %v218, 4294901760
        %1121 = vmatprep.subr.mxu0 %v1120
        %v1122 = vand.u32 %v217, 4294901760
        %1123 = vmatpush1.msra.mxu0 %v1122
        %v1124 = vand.u32 %v220, 4294901760
        %1125 = vmatprep.subr.mxu0 %v1124
        %v1126 = vand.u32 %v219, 4294901760
        %1127 = vmatpush1.msra.mxu0 %v1126
        %v1128 = vand.u32 %v222, 4294901760
        %1129 = vmatprep.subr.mxu0 %v1128
        %v1130 = vand.u32 %v221, 4294901760
        %1131 = vmatpush1.msra.mxu0 %v1130
        %v1132 = vand.u32 %v224, 4294901760
        %1133 = vmatprep.subr.mxu0 %v1132
        %v1134 = vand.u32 %v223, 4294901760
        %1135 = vmatpush1.msra.mxu0 %v1134
        %v1136 = vand.u32 %v226, 4294901760
        %1137 = vmatprep.subr.mxu0 %v1136
        %v1138 = vand.u32 %v225, 4294901760
        %1139 = vmatpush1.msra.mxu0 %v1138
        %v1140 = vand.u32 %v228, 4294901760
        %1141 = vmatprep.subr.mxu0 %v1140
        %v1142 = vand.u32 %v227, 4294901760
        %1143 = vmatpush1.msra.mxu0 %v1142
        %v1144 = vand.u32 %v230, 4294901760
        %1145 = vmatprep.subr.mxu0 %v1144
        %v1146 = vand.u32 %v229, 4294901760
        %1147 = vmatpush1.msra.mxu0 %v1146
        %v1148 = vand.u32 %v232, 4294901760
        %1149 = vmatprep.subr.mxu0 %v1148
        %v1150 = vand.u32 %v231, 4294901760
        %1151 = vmatpush1.msra.mxu0 %v1150
        %v1152 = vand.u32 %v234, 4294901760
        %1153 = vmatprep.subr.mxu0 %v1152
        %v1154 = vand.u32 %v233, 4294901760
        %1155 = vmatpush1.msra.mxu0 %v1154
        %v1156 = vand.u32 %v236, 4294901760
        %1157 = vmatprep.subr.mxu0 %v1156
        %v1158 = vand.u32 %v235, 4294901760
        %1159 = vmatpush1.msra.mxu0 %v1158
        %v1160 = vand.u32 %v238, 4294901760
        %1161 = vmatprep.subr.mxu0 %v1160
        %v1162 = vand.u32 %v237, 4294901760
        %1163 = vmatpush1.msra.mxu0 %v1162
        %v1164 = vand.u32 %v240, 4294901760
        %1165 = vmatprep.subr.mxu0 %v1164
        %v1166 = vand.u32 %v239, 4294901760
        %1167 = vmatpush1.msra.mxu0 %v1166
        %v1168 = vand.u32 %v242, 4294901760
        %1169 = vmatprep.subr.mxu0 %v1168
        %v1170 = vand.u32 %v241, 4294901760
        %1171 = vmatpush1.msra.mxu0 %v1170
        %v1172 = vand.u32 %v244, 4294901760
        %1173 = vmatprep.subr.mxu0 %v1172
        %v1174 = vand.u32 %v243, 4294901760
        %1175 = vmatpush1.msra.mxu0 %v1174
        %1176 = vmatprep.subr.mxu0 0.0
        %1177 = vmatpush1.msra.mxu0 0.0
        %1178 = vmatprep.subr.mxu0 0.0
        %1179 = vmatpush1.msra.mxu0 0.0
        %1180 = vmatprep.subr.mxu0 0.0
        %1181 = vmatpush1.msra.mxu0 0.0
        %1182 = vmatprep.subr.mxu0 0.0
        %1183 = vmatpush1.msra.mxu0 0.0
        %1184 = vmatprep.subr.mxu0 0.0
        %1185 = vmatpush1.msra.mxu0 0.0
        %1186 = vmatprep.subr.mxu0 0.0
        %1187 = vmatpush1.msra.mxu0 0.0
        %1188 = vmatprep.subr.mxu0 0.0
        %1189 = vmatpush1.msra.mxu0 0.0
        %1190 = vmatprep.subr.mxu0 0.0
        %1191 = vmatpush1.msra.mxu0 0.0
        %1192 = vmatprep.subr.mxu0 0.0
        %1193 = vmatpush1.msra.mxu0 0.0
        %1194 = vmatprep.subr.mxu0 0.0
        %1195 = vmatpush1.msra.mxu0 0.0
        %1196 = vmatprep.subr.mxu0 0.0
        %1197 = vmatpush1.msra.mxu0 0.0
        %1198 = vmatprep.subr.mxu0 0.0
        %1199 = vmatpush1.msra.mxu0 0.0
        %1200 = vmatprep.subr.mxu0 0.0
        %1201 = vmatpush1.msra.mxu0 0.0
        %1202 = vmatprep.subr.mxu0 0.0
        %1203 = vmatpush1.msra.mxu0 0.0
        %1204 = vmatprep.subr.mxu0 0.0
        %1205 = vmatpush1.msra.mxu0 0.0
        %1206 = vmatprep.subr.mxu0 0.0
        %1207 = vmatpush1.msra.mxu0 0.0
        %1208 = vmatprep.mubr.f32.mxu0 0.0
        %v1209 = vand.u32 %v197, 4294901760
        %v1210 = vsub.f32 %v197, %v1209
        %v1211 = vand.u32 %v1210, 4294901760
        %1212 = vmatmul.mubr.f32.gmra.mrb[0].mxu0 %v1211
        %v1213 = vpop.f32.mrb[0].mxu0
        %v1214 = vadd.f32 %v988, %v1213
        %v1215 = vpop.f32.mrb[0].mxu0
        %v1216 = vadd.f32 %v990, %v1215
        %1217 = vmatprep.mubr.f32.mxu0 0.0
        %v1218 = vand.u32 %v198, 4294901760
        %v1219 = vsub.f32 %v198, %v1218
        %v1220 = vand.u32 %v1219, 4294901760
        %1221 = vmatmul.mubr.f32.gmra.mrb[0].mxu0 %v1220
        %v1222 = vpop.f32.mrb[0].mxu0
        %v1223 = vadd.f32 %v996, %v1222
        %v1224 = vpop.f32.mrb[0].mxu0
        %v1225 = vadd.f32 %v998, %v1224
        %1226 = vmatprep.mubr.f32.mxu0 0.0
        %v1227 = vand.u32 %v199, 4294901760
        %v1228 = vsub.f32 %v199, %v1227
        %v1229 = vand.u32 %v1228, 4294901760
        %1230 = vmatmul.mubr.f32.gmra.mrb[0].mxu0 %v1229
        %v1231 = vpop.f32.mrb[0].mxu0
        %v1232 = vadd.f32 %v1004, %v1231
        %v1233 = vpop.f32.mrb[0].mxu0
        %v1234 = vadd.f32 %v1006, %v1233
        %1235 = vmatprep.mubr.f32.mxu0 0.0
        %v1236 = vand.u32 %v200, 4294901760
        %v1237 = vsub.f32 %v200, %v1236
        %v1238 = vand.u32 %v1237, 4294901760
        %1239 = vmatmul.mubr.f32.gmra.mrb[0].mxu0 %v1238
        %v1240 = vpop.f32.mrb[0].mxu0
        %v1241 = vadd.f32 %v1012, %v1240
        %v1242 = vpop.f32.mrb[0].mxu0
        %v1243 = vadd.f32 %v1014, %v1242
        %1244 = vmatprep.mubr.f32.mxu0 0.0
        %v1245 = vand.u32 %v201, 4294901760
        %v1246 = vsub.f32 %v201, %v1245
        %v1247 = vand.u32 %v1246, 4294901760
        %1248 = vmatmul.mubr.f32.gmra.mrb[0].mxu0 %v1247
        %v1249 = vpop.f32.mrb[0].mxu0
        %v1250 = vadd.f32 %v1020, %v1249
        %v1251 = vpop.f32.mrb[0].mxu0
        %v1252 = vadd.f32 %v1022, %v1251
        %1253 = vmatprep.mubr.f32.mxu0 0.0
        %v1254 = vand.u32 %v202, 4294901760
        %v1255 = vsub.f32 %v202, %v1254
        %v1256 = vand.u32 %v1255, 4294901760
        %1257 = vmatmul.mubr.f32.gmra.mrb[0].mxu0 %v1256
        %v1258 = vpop.f32.mrb[0].mxu0
        %v1259 = vadd.f32 %v1028, %v1258
        %v1260 = vpop.f32.mrb[0].mxu0
        %v1261 = vadd.f32 %v1030, %v1260
        %1262 = vmatprep.mubr.f32.mxu0 0.0
        %v1263 = vand.u32 %v203, 4294901760
        %v1264 = vsub.f32 %v203, %v1263
        %v1265 = vand.u32 %v1264, 4294901760
        %1266 = vmatmul.mubr.f32.gmra.mrb[0].mxu0 %v1265
        %v1267 = vpop.f32.mrb[0].mxu0
        %v1268 = vadd.f32 %v1036, %v1267
        %v1269 = vpop.f32.mrb[0].mxu0
        %v1270 = vadd.f32 %v1038, %v1269
        %1271 = vmatprep.mubr.f32.mxu0 0.0
        %v1272 = vand.u32 %v204, 4294901760
        %v1273 = vsub.f32 %v204, %v1272
        %v1274 = vand.u32 %v1273, 4294901760
        %1275 = vmatmul.mubr.f32.gmra.mrb[0].mxu0 %v1274
        %v1276 = vpop.f32.mrb[0].mxu0
        %v1277 = vadd.f32 %v1044, %v1276
        %v1278 = vpop.f32.mrb[0].mxu0
        %v1279 = vadd.f32 %v1046, %v1278
        %1280 = vmatprep.mubr.f32.mxu0 0.0
        %v1281 = vand.u32 %v205, 4294901760
        %v1282 = vsub.f32 %v205, %v1281
        %v1283 = vand.u32 %v1282, 4294901760
        %1284 = vmatmul.mubr.f32.gmra.mrb[0].mxu0 %v1283
        %v1285 = vpop.f32.mrb[0].mxu0
        %v1286 = vadd.f32 %v1052, %v1285
        %v1287 = vpop.f32.mrb[0].mxu0
        %v1288 = vadd.f32 %v1054, %v1287
        %1289 = vmatprep.mubr.f32.mxu0 0.0
        %v1290 = vand.u32 %v206, 4294901760
        %v1291 = vsub.f32 %v206, %v1290
        %v1292 = vand.u32 %v1291, 4294901760
        %1293 = vmatmul.mubr.f32.gmra.mrb[0].mxu0 %v1292
        %v1294 = vpop.f32.mrb[0].mxu0
        %v1295 = vadd.f32 %v1060, %v1294
        %v1296 = vpop.f32.mrb[0].mxu0
        %v1297 = vadd.f32 %v1062, %v1296
        %1298 = vmatprep.mubr.f32.mxu0 0.0
        %v1299 = vand.u32 %v207, 4294901760
        %v1300 = vsub.f32 %v207, %v1299
        %v1301 = vand.u32 %v1300, 4294901760
        %1302 = vmatmul.mubr.f32.gmra.mrb[0].mxu0 %v1301
        %v1303 = vpop.f32.mrb[0].mxu0
        %v1304 = vadd.f32 %v1068, %v1303
        %v1305 = vpop.f32.mrb[0].mxu0
        %v1306 = vadd.f32 %v1070, %v1305
        %1307 = vmatprep.mubr.f32.mxu0 0.0
        %v1308 = vand.u32 %v208, 4294901760
        %v1309 = vsub.f32 %v208, %v1308
        %v1310 = vand.u32 %v1309, 4294901760
        %1311 = vmatmul.mubr.f32.gmra.mrb[0].mxu0 %v1310
        %v1312 = vpop.f32.mrb[0].mxu0
        %v1313 = vadd.f32 %v1076, %v1312
        %v1314 = vpop.f32.mrb[0].mxu0
        %v1315 = vadd.f32 %v1078, %v1314
        %1316 = vmatprep.mubr.f32.mxu0 0.0
        %v1317 = vand.u32 %v209, 4294901760
        %v1318 = vsub.f32 %v209, %v1317
        %v1319 = vand.u32 %v1318, 4294901760
        %1320 = vmatmul.mubr.f32.gmra.mrb[0].mxu0 %v1319
        %v1321 = vpop.f32.mrb[0].mxu0
        %v1322 = vadd.f32 %v1084, %v1321
        %v1323 = vpop.f32.mrb[0].mxu0
        %v1324 = vadd.f32 %v1086, %v1323
        %1325 = vmatprep.mubr.f32.mxu0 0.0
        %v1326 = vand.u32 %v210, 4294901760
        %v1327 = vsub.f32 %v210, %v1326
        %v1328 = vand.u32 %v1327, 4294901760
        %1329 = vmatmul.mubr.f32.gmra.mrb[0].mxu0 %v1328
        %v1330 = vpop.f32.mrb[0].mxu0
        %v1331 = vadd.f32 %v1092, %v1330
        %v1332 = vpop.f32.mrb[0].mxu0
        %v1333 = vadd.f32 %v1094, %v1332
        %1334 = vmatprep.mubr.f32.mxu0 0.0
        %v1335 = vand.u32 %v211, 4294901760
        %v1336 = vsub.f32 %v211, %v1335
        %v1337 = vand.u32 %v1336, 4294901760
        %1338 = vmatmul.mubr.f32.gmra.mrb[0].mxu0 %v1337
        %v1339 = vpop.f32.mrb[0].mxu0
        %v1340 = vadd.f32 %v1100, %v1339
        %v1341 = vpop.f32.mrb[0].mxu0
        %v1342 = vadd.f32 %v1102, %v1341
        %1343 = vmatprep.mubr.f32.mxu0 0.0
        %v1344 = vand.u32 %v212, 4294901760
        %v1345 = vsub.f32 %v212, %v1344
        %v1346 = vand.u32 %v1345, 4294901760
        %1347 = vmatmul.mubr.f32.gmra.mrb[0].mxu0 %v1346
        %v1348 = vpop.f32.mrb[0].mxu0
        %v1349 = vadd.f32 %v1108, %v1348
        %v1350 = vpop.f32.mrb[0].mxu0
        %v1351 = vadd.f32 %v1110, %v1350
        %1352 = vdwg.mxu0
        %v1353 = vand.u32 %v214, 4294901760
        %v1354 = vsub.f32 %v214, %v1353
        %v1355 = vand.u32 %v1354, 4294901760
        %1356 = vmatprep.subr.mxu0 %v1355
        %v1357 = vand.u32 %v213, 4294901760
        %v1358 = vsub.f32 %v213, %v1357
        %v1359 = vand.u32 %v1358, 4294901760
        %1360 = vmatpush1.msra.mxu0 %v1359
        %v1361 = vand.u32 %v216, 4294901760
        %v1362 = vsub.f32 %v216, %v1361
        %v1363 = vand.u32 %v1362, 4294901760
        %1364 = vmatprep.subr.mxu0 %v1363
        %v1365 = vand.u32 %v215, 4294901760
        %v1366 = vsub.f32 %v215, %v1365
        %v1367 = vand.u32 %v1366, 4294901760
        %1368 = vmatpush1.msra.mxu0 %v1367
        %v1369 = vand.u32 %v218, 4294901760
        %v1370 = vsub.f32 %v218, %v1369
        %v1371 = vand.u32 %v1370, 4294901760
        %1372 = vmatprep.subr.mxu0 %v1371
        %v1373 = vand.u32 %v217, 4294901760
        %v1374 = vsub.f32 %v217, %v1373
        %v1375 = vand.u32 %v1374, 4294901760
        %1376 = vmatpush1.msra.mxu0 %v1375
        %v1377 = vand.u32 %v220, 4294901760
        %v1378 = vsub.f32 %v220, %v1377
        %v1379 = vand.u32 %v1378, 4294901760
        %1380 = vmatprep.subr.mxu0 %v1379
        %v1381 = vand.u32 %v219, 4294901760
        %v1382 = vsub.f32 %v219, %v1381
        %v1383 = vand.u32 %v1382, 4294901760
        %1384 = vmatpush1.msra.mxu0 %v1383
        %v1385 = vand.u32 %v222, 4294901760
        %v1386 = vsub.f32 %v222, %v1385
        %v1387 = vand.u32 %v1386, 4294901760
        %1388 = vmatprep.subr.mxu0 %v1387
        %v1389 = vand.u32 %v221, 4294901760
        %v1390 = vsub.f32 %v221, %v1389
        %v1391 = vand.u32 %v1390, 4294901760
        %1392 = vmatpush1.msra.mxu0 %v1391
        %v1393 = vand.u32 %v224, 4294901760
        %v1394 = vsub.f32 %v224, %v1393
        %v1395 = vand.u32 %v1394, 4294901760
        %1396 = vmatprep.subr.mxu0 %v1395
        %v1397 = vand.u32 %v223, 4294901760
        %v1398 = vsub.f32 %v223, %v1397
        %v1399 = vand.u32 %v1398, 4294901760
        %1400 = vmatpush1.msra.mxu0 %v1399
        %v1401 = vand.u32 %v226, 4294901760
        %v1402 = vsub.f32 %v226, %v1401
        %v1403 = vand.u32 %v1402, 4294901760
        %1404 = vmatprep.subr.mxu0 %v1403
        %v1405 = vand.u32 %v225, 4294901760
        %v1406 = vsub.f32 %v225, %v1405
        %v1407 = vand.u32 %v1406, 4294901760
        %1408 = vmatpush1.msra.mxu0 %v1407
        %v1409 = vand.u32 %v228, 4294901760
        %v1410 = vsub.f32 %v228, %v1409
        %v1411 = vand.u32 %v1410, 4294901760
        %1412 = vmatprep.subr.mxu0 %v1411
        %v1413 = vand.u32 %v227, 4294901760
        %v1414 = vsub.f32 %v227, %v1413
        %v1415 = vand.u32 %v1414, 4294901760
        %1416 = vmatpush1.msra.mxu0 %v1415
        %v1417 = vand.u32 %v230, 4294901760
        %v1418 = vsub.f32 %v230, %v1417
        %v1419 = vand.u32 %v1418, 4294901760
        %1420 = vmatprep.subr.mxu0 %v1419
        %v1421 = vand.u32 %v229, 4294901760
        %v1422 = vsub.f32 %v229, %v1421
        %v1423 = vand.u32 %v1422, 4294901760
        %1424 = vmatpush1.msra.mxu0 %v1423
        %v1425 = vand.u32 %v232, 4294901760
        %v1426 = vsub.f32 %v232, %v1425
        %v1427 = vand.u32 %v1426, 4294901760
        %1428 = vmatprep.subr.mxu0 %v1427
        %v1429 = vand.u32 %v231, 4294901760
        %v1430 = vsub.f32 %v231, %v1429
        %v1431 = vand.u32 %v1430, 4294901760
        %1432 = vmatpush1.msra.mxu0 %v1431
        %v1433 = vand.u32 %v234, 4294901760
        %v1434 = vsub.f32 %v234, %v1433
        %v1435 = vand.u32 %v1434, 4294901760
        %1436 = vmatprep.subr.mxu0 %v1435
        %v1437 = vand.u32 %v233, 4294901760
        %v1438 = vsub.f32 %v233, %v1437
        %v1439 = vand.u32 %v1438, 4294901760
        %1440 = vmatpush1.msra.mxu0 %v1439
        %v1441 = vand.u32 %v236, 4294901760
        %v1442 = vsub.f32 %v236, %v1441
        %v1443 = vand.u32 %v1442, 4294901760
        %1444 = vmatprep.subr.mxu0 %v1443
        %v1445 = vand.u32 %v235, 4294901760
        %v1446 = vsub.f32 %v235, %v1445
        %v1447 = vand.u32 %v1446, 4294901760
        %1448 = vmatpush1.msra.mxu0 %v1447
        %v1449 = vand.u32 %v238, 4294901760
        %v1450 = vsub.f32 %v238, %v1449
        %v1451 = vand.u32 %v1450, 4294901760
        %1452 = vmatprep.subr.mxu0 %v1451
        %v1453 = vand.u32 %v237, 4294901760
        %v1454 = vsub.f32 %v237, %v1453
        %v1455 = vand.u32 %v1454, 4294901760
        %1456 = vmatpush1.msra.mxu0 %v1455
        %v1457 = vand.u32 %v240, 4294901760
        %v1458 = vsub.f32 %v240, %v1457
        %v1459 = vand.u32 %v1458, 4294901760
        %1460 = vmatprep.subr.mxu0 %v1459
        %v1461 = vand.u32 %v239, 4294901760
        %v1462 = vsub.f32 %v239, %v1461
        %v1463 = vand.u32 %v1462, 4294901760
        %1464 = vmatpush1.msra.mxu0 %v1463
        %v1465 = vand.u32 %v242, 4294901760
        %v1466 = vsub.f32 %v242, %v1465
        %v1467 = vand.u32 %v1466, 4294901760
        %1468 = vmatprep.subr.mxu0 %v1467
        %v1469 = vand.u32 %v241, 4294901760
        %v1470 = vsub.f32 %v241, %v1469
        %v1471 = vand.u32 %v1470, 4294901760
        %1472 = vmatpush1.msra.mxu0 %v1471
        %v1473 = vand.u32 %v244, 4294901760
        %v1474 = vsub.f32 %v244, %v1473
        %v1475 = vand.u32 %v1474, 4294901760
        %1476 = vmatprep.subr.mxu0 %v1475
        %v1477 = vand.u32 %v243, 4294901760
        %v1478 = vsub.f32 %v243, %v1477
        %v1479 = vand.u32 %v1478, 4294901760
        %1480 = vmatpush1.msra.mxu0 %v1479
        %1481 = vmatprep.subr.mxu0 0.0
        %1482 = vmatpush1.msra.mxu0 0.0
        %1483 = vmatprep.subr.mxu0 0.0
        %1484 = vmatpush1.msra.mxu0 0.0
        %1485 = vmatprep.subr.mxu0 0.0
        %1486 = vmatpush1.msra.mxu0 0.0
        %1487 = vmatprep.subr.mxu0 0.0
        %1488 = vmatpush1.msra.mxu0 0.0
        %1489 = vmatprep.subr.mxu0 0.0
        %1490 = vmatpush1.msra.mxu0 0.0
        %1491 = vmatprep.subr.mxu0 0.0
        %1492 = vmatpush1.msra.mxu0 0.0
        %1493 = vmatprep.subr.mxu0 0.0
        %1494 = vmatpush1.msra.mxu0 0.0
        %1495 = vmatprep.subr.mxu0 0.0
        %1496 = vmatpush1.msra.mxu0 0.0
        %1497 = vmatprep.subr.mxu0 0.0
        %1498 = vmatpush1.msra.mxu0 0.0
        %1499 = vmatprep.subr.mxu0 0.0
        %1500 = vmatpush1.msra.mxu0 0.0
        %1501 = vmatprep.subr.mxu0 0.0
        %1502 = vmatpush1.msra.mxu0 0.0
        %1503 = vmatprep.subr.mxu0 0.0
        %1504 = vmatpush1.msra.mxu0 0.0
        %1505 = vmatprep.subr.mxu0 0.0
        %1506 = vmatpush1.msra.mxu0 0.0
        %1507 = vmatprep.subr.mxu0 0.0
        %1508 = vmatpush1.msra.mxu0 0.0
        %1509 = vmatprep.subr.mxu0 0.0
        %1510 = vmatpush1.msra.mxu0 0.0
        %1511 = vmatprep.subr.mxu0 0.0
        %1512 = vmatpush1.msra.mxu0 0.0
        %1513 = vmatprep.mubr.f32.mxu0 0.0
        %v1514 = vand.u32 %v197, 4294901760
        %1515 = vmatmul.mubr.f32.gmra.mrb[0].mxu0 %v1514
        %v1516 = vpop.f32.mrb[0].mxu0
        %v1517 = vadd.f32 %v1214, %v1516
        %v1518 = vpop.f32.mrb[0].mxu0
        %v1519 = vadd.f32 %v1216, %v1518
        %1520 = vmatprep.mubr.f32.mxu0 0.0
        %v1521 = vand.u32 %v198, 4294901760
        %1522 = vmatmul.mubr.f32.gmra.mrb[0].mxu0 %v1521
        %v1523 = vpop.f32.mrb[0].mxu0
        %v1524 = vadd.f32 %v1223, %v1523
        %v1525 = vpop.f32.mrb[0].mxu0
        %v1526 = vadd.f32 %v1225, %v1525
        %1527 = vmatprep.mubr.f32.mxu0 0.0
        %v1528 = vand.u32 %v199, 4294901760
        %1529 = vmatmul.mubr.f32.gmra.mrb[0].mxu0 %v1528
        %v1530 = vpop.f32.mrb[0].mxu0
        %v1531 = vadd.f32 %v1232, %v1530
        %v1532 = vpop.f32.mrb[0].mxu0
        %v1533 = vadd.f32 %v1234, %v1532
        %1534 = vmatprep.mubr.f32.mxu0 0.0
        %v1535 = vand.u32 %v200, 4294901760
        %1536 = vmatmul.mubr.f32.gmra.mrb[0].mxu0 %v1535
        %v1537 = vpop.f32.mrb[0].mxu0
        %v1538 = vadd.f32 %v1241, %v1537
        %v1539 = vpop.f32.mrb[0].mxu0
        %v1540 = vadd.f32 %v1243, %v1539
        %1541 = vmatprep.mubr.f32.mxu0 0.0
        %v1542 = vand.u32 %v201, 4294901760
        %1543 = vmatmul.mubr.f32.gmra.mrb[0].mxu0 %v1542
        %v1544 = vpop.f32.mrb[0].mxu0
        %v1545 = vadd.f32 %v1250, %v1544
        %v1546 = vpop.f32.mrb[0].mxu0
        %v1547 = vadd.f32 %v1252, %v1546
        %1548 = vmatprep.mubr.f32.mxu0 0.0
        %v1549 = vand.u32 %v202, 4294901760
        %1550 = vmatmul.mubr.f32.gmra.mrb[0].mxu0 %v1549
        %v1551 = vpop.f32.mrb[0].mxu0
        %v1552 = vadd.f32 %v1259, %v1551
        %v1553 = vpop.f32.mrb[0].mxu0
        %v1554 = vadd.f32 %v1261, %v1553
        %1555 = vmatprep.mubr.f32.mxu0 0.0
        %v1556 = vand.u32 %v203, 4294901760
        %1557 = vmatmul.mubr.f32.gmra.mrb[0].mxu0 %v1556
        %v1558 = vpop.f32.mrb[0].mxu0
        %v1559 = vadd.f32 %v1268, %v1558
        %v1560 = vpop.f32.mrb[0].mxu0
        %v1561 = vadd.f32 %v1270, %v1560
        %1562 = vmatprep.mubr.f32.mxu0 0.0
        %v1563 = vand.u32 %v204, 4294901760
        %1564 = vmatmul.mubr.f32.gmra.mrb[0].mxu0 %v1563
        %v1565 = vpop.f32.mrb[0].mxu0
        %v1566 = vadd.f32 %v1277, %v1565
        %v1567 = vpop.f32.mrb[0].mxu0
        %v1568 = vadd.f32 %v1279, %v1567
        %1569 = vmatprep.mubr.f32.mxu0 0.0
        %v1570 = vand.u32 %v205, 4294901760
        %1571 = vmatmul.mubr.f32.gmra.mrb[0].mxu0 %v1570
        %v1572 = vpop.f32.mrb[0].mxu0
        %v1573 = vadd.f32 %v1286, %v1572
        %v1574 = vpop.f32.mrb[0].mxu0
        %v1575 = vadd.f32 %v1288, %v1574
        %1576 = vmatprep.mubr.f32.mxu0 0.0
        %v1577 = vand.u32 %v206, 4294901760
        %1578 = vmatmul.mubr.f32.gmra.mrb[0].mxu0 %v1577
        %v1579 = vpop.f32.mrb[0].mxu0
        %v1580 = vadd.f32 %v1295, %v1579
        %v1581 = vpop.f32.mrb[0].mxu0
        %v1582 = vadd.f32 %v1297, %v1581
        %1583 = vmatprep.mubr.f32.mxu0 0.0
        %v1584 = vand.u32 %v207, 4294901760
        %1585 = vmatmul.mubr.f32.gmra.mrb[0].mxu0 %v1584
        %v1586 = vpop.f32.mrb[0].mxu0
        %v1587 = vadd.f32 %v1304, %v1586
        %v1588 = vpop.f32.mrb[0].mxu0
        %v1589 = vadd.f32 %v1306, %v1588
        %1590 = vmatprep.mubr.f32.mxu0 0.0
        %v1591 = vand.u32 %v208, 4294901760
        %1592 = vmatmul.mubr.f32.gmra.mrb[0].mxu0 %v1591
        %v1593 = vpop.f32.mrb[0].mxu0
        %v1594 = vadd.f32 %v1313, %v1593
        %v1595 = vpop.f32.mrb[0].mxu0
        %v1596 = vadd.f32 %v1315, %v1595
        %1597 = vmatprep.mubr.f32.mxu0 0.0
        %v1598 = vand.u32 %v209, 4294901760
        %1599 = vmatmul.mubr.f32.gmra.mrb[0].mxu0 %v1598
        %v1600 = vpop.f32.mrb[0].mxu0
        %v1601 = vadd.f32 %v1322, %v1600
        %v1602 = vpop.f32.mrb[0].mxu0
        %v1603 = vadd.f32 %v1324, %v1602
        %1604 = vmatprep.mubr.f32.mxu0 0.0
        %v1605 = vand.u32 %v210, 4294901760
        %1606 = vmatmul.mubr.f32.gmra.mrb[0].mxu0 %v1605
        %v1607 = vpop.f32.mrb[0].mxu0
        %v1608 = vadd.f32 %v1331, %v1607
        %v1609 = vpop.f32.mrb[0].mxu0
        %v1610 = vadd.f32 %v1333, %v1609
        %1611 = vmatprep.mubr.f32.mxu0 0.0
        %v1612 = vand.u32 %v211, 4294901760
        %1613 = vmatmul.mubr.f32.gmra.mrb[0].mxu0 %v1612
        %v1614 = vpop.f32.mrb[0].mxu0
        %v1615 = vadd.f32 %v1340, %v1614
        %v1616 = vpop.f32.mrb[0].mxu0
        %v1617 = vadd.f32 %v1342, %v1616
        %1618 = vmatprep.mubr.f32.mxu0 0.0
        %v1619 = vand.u32 %v212, 4294901760
        %1620 = vmatmul.mubr.f32.gmra.mrb[0].mxu0 %v1619
        %v1621 = vpop.f32.mrb[0].mxu0
        %v1622 = vadd.f32 %v1349, %v1621
        %v1623 = vpop.f32.mrb[0].mxu0
        %v1624 = vadd.f32 %v1351, %v1623
        %1625 = vdwg.mxu0
        %v1626 = vand.u32 %v214, 4294901760
        %1627 = vmatprep.subr.mxu0 %v1626
        %v1628 = vand.u32 %v213, 4294901760
        %1629 = vmatpush1.msra.mxu0 %v1628
        %v1630 = vand.u32 %v216, 4294901760
        %1631 = vmatprep.subr.mxu0 %v1630
        %v1632 = vand.u32 %v215, 4294901760
        %1633 = vmatpush1.msra.mxu0 %v1632
        %v1634 = vand.u32 %v218, 4294901760
        %1635 = vmatprep.subr.mxu0 %v1634
        %v1636 = vand.u32 %v217, 4294901760
        %1637 = vmatpush1.msra.mxu0 %v1636
        %v1638 = vand.u32 %v220, 4294901760
        %1639 = vmatprep.subr.mxu0 %v1638
        %v1640 = vand.u32 %v219, 4294901760
        %1641 = vmatpush1.msra.mxu0 %v1640
        %v1642 = vand.u32 %v222, 4294901760
        %1643 = vmatprep.subr.mxu0 %v1642
        %v1644 = vand.u32 %v221, 4294901760
        %1645 = vmatpush1.msra.mxu0 %v1644
        %v1646 = vand.u32 %v224, 4294901760
        %1647 = vmatprep.subr.mxu0 %v1646
        %v1648 = vand.u32 %v223, 4294901760
        %1649 = vmatpush1.msra.mxu0 %v1648
        %v1650 = vand.u32 %v226, 4294901760
        %1651 = vmatprep.subr.mxu0 %v1650
        %v1652 = vand.u32 %v225, 4294901760
        %1653 = vmatpush1.msra.mxu0 %v1652
        %v1654 = vand.u32 %v228, 4294901760
        %1655 = vmatprep.subr.mxu0 %v1654
        %v1656 = vand.u32 %v227, 4294901760
        %1657 = vmatpush1.msra.mxu0 %v1656
        %v1658 = vand.u32 %v230, 4294901760
        %1659 = vmatprep.subr.mxu0 %v1658
        %v1660 = vand.u32 %v229, 4294901760
        %1661 = vmatpush1.msra.mxu0 %v1660
        %v1662 = vand.u32 %v232, 4294901760
        %1663 = vmatprep.subr.mxu0 %v1662
        %v1664 = vand.u32 %v231, 4294901760
        %1665 = vmatpush1.msra.mxu0 %v1664
        %v1666 = vand.u32 %v234, 4294901760
        %1667 = vmatprep.subr.mxu0 %v1666
        %v1668 = vand.u32 %v233, 4294901760
        %1669 = vmatpush1.msra.mxu0 %v1668
        %v1670 = vand.u32 %v236, 4294901760
        %1671 = vmatprep.subr.mxu0 %v1670
        %v1672 = vand.u32 %v235, 4294901760
        %1673 = vmatpush1.msra.mxu0 %v1672
        %v1674 = vand.u32 %v238, 4294901760
        %1675 = vmatprep.subr.mxu0 %v1674
        %v1676 = vand.u32 %v237, 4294901760
        %1677 = vmatpush1.msra.mxu0 %v1676
        %v1678 = vand.u32 %v240, 4294901760
        %1679 = vmatprep.subr.mxu0 %v1678
        %v1680 = vand.u32 %v239, 4294901760
        %1681 = vmatpush1.msra.mxu0 %v1680
        %v1682 = vand.u32 %v242, 4294901760
        %1683 = vmatprep.subr.mxu0 %v1682
        %v1684 = vand.u32 %v241, 4294901760
        %1685 = vmatpush1.msra.mxu0 %v1684
        %v1686 = vand.u32 %v244, 4294901760
        %1687 = vmatprep.subr.mxu0 %v1686
        %v1688 = vand.u32 %v243, 4294901760
        %1689 = vmatpush1.msra.mxu0 %v1688
        %1690 = vmatprep.subr.mxu0 0.0
        %1691 = vmatpush1.msra.mxu0 0.0
        %1692 = vmatprep.subr.mxu0 0.0
        %1693 = vmatpush1.msra.mxu0 0.0
        %1694 = vmatprep.subr.mxu0 0.0
        %1695 = vmatpush1.msra.mxu0 0.0
        %1696 = vmatprep.subr.mxu0 0.0
        %1697 = vmatpush1.msra.mxu0 0.0
        %1698 = vmatprep.subr.mxu0 0.0
        %1699 = vmatpush1.msra.mxu0 0.0
        %1700 = vmatprep.subr.mxu0 0.0
        %1701 = vmatpush1.msra.mxu0 0.0
        %1702 = vmatprep.subr.mxu0 0.0
        %1703 = vmatpush1.msra.mxu0 0.0
        %1704 = vmatprep.subr.mxu0 0.0
        %1705 = vmatpush1.msra.mxu0 0.0
        %1706 = vmatprep.subr.mxu0 0.0
        %1707 = vmatpush1.msra.mxu0 0.0
        %1708 = vmatprep.subr.mxu0 0.0
        %1709 = vmatpush1.msra.mxu0 0.0
        %1710 = vmatprep.subr.mxu0 0.0
        %1711 = vmatpush1.msra.mxu0 0.0
        %1712 = vmatprep.subr.mxu0 0.0
        %1713 = vmatpush1.msra.mxu0 0.0
        %1714 = vmatprep.subr.mxu0 0.0
        %1715 = vmatpush1.msra.mxu0 0.0
        %1716 = vmatprep.subr.mxu0 0.0
        %1717 = vmatpush1.msra.mxu0 0.0
        %1718 = vmatprep.subr.mxu0 0.0
        %1719 = vmatpush1.msra.mxu0 0.0
        %1720 = vmatprep.subr.mxu0 0.0
        %1721 = vmatpush1.msra.mxu0 0.0
        %1722 = vmatprep.mubr.f32.mxu0 0.0
        %v1723 = vand.u32 %v197, 4294901760
        %1724 = vmatmul.mubr.f32.gmra.mrb[0].mxu0 %v1723
        %v1725 = vpop.f32.mrb[0].mxu0
        %v1726 = vadd.f32 %v1517, %v1725
        %v1727 = vpop.f32.mrb[0].mxu0
        %v1728 = vadd.f32 %v1519, %v1727
        %1729 = vmatprep.mubr.f32.mxu0 0.0
        %v1730 = vand.u32 %v198, 4294901760
        %1731 = vmatmul.mubr.f32.gmra.mrb[0].mxu0 %v1730
        %v1732 = vpop.f32.mrb[0].mxu0
        %v1733 = vadd.f32 %v1524, %v1732
        %v1734 = vpop.f32.mrb[0].mxu0
        %v1735 = vadd.f32 %v1526, %v1734
        %1736 = vmatprep.mubr.f32.mxu0 0.0
        %v1737 = vand.u32 %v199, 4294901760
        %1738 = vmatmul.mubr.f32.gmra.mrb[0].mxu0 %v1737
        %v1739 = vpop.f32.mrb[0].mxu0
        %v1740 = vadd.f32 %v1531, %v1739
        %v1741 = vpop.f32.mrb[0].mxu0
        %v1742 = vadd.f32 %v1533, %v1741
        %1743 = vmatprep.mubr.f32.mxu0 0.0
        %v1744 = vand.u32 %v200, 4294901760
        %1745 = vmatmul.mubr.f32.gmra.mrb[0].mxu0 %v1744
        %v1746 = vpop.f32.mrb[0].mxu0
        %v1747 = vadd.f32 %v1538, %v1746
        %v1748 = vpop.f32.mrb[0].mxu0
        %v1749 = vadd.f32 %v1540, %v1748
        %1750 = vmatprep.mubr.f32.mxu0 0.0
        %v1751 = vand.u32 %v201, 4294901760
        %1752 = vmatmul.mubr.f32.gmra.mrb[0].mxu0 %v1751
        %v1753 = vpop.f32.mrb[0].mxu0
        %v1754 = vadd.f32 %v1545, %v1753
        %v1755 = vpop.f32.mrb[0].mxu0
        %v1756 = vadd.f32 %v1547, %v1755
        %1757 = vmatprep.mubr.f32.mxu0 0.0
        %v1758 = vand.u32 %v202, 4294901760
        %1759 = vmatmul.mubr.f32.gmra.mrb[0].mxu0 %v1758
        %v1760 = vpop.f32.mrb[0].mxu0
        %v1761 = vadd.f32 %v1552, %v1760
        %v1762 = vpop.f32.mrb[0].mxu0
        %v1763 = vadd.f32 %v1554, %v1762
        %1764 = vmatprep.mubr.f32.mxu0 0.0
        %v1765 = vand.u32 %v203, 4294901760
        %1766 = vmatmul.mubr.f32.gmra.mrb[0].mxu0 %v1765
        %v1767 = vpop.f32.mrb[0].mxu0
        %v1768 = vadd.f32 %v1559, %v1767
        %v1769 = vpop.f32.mrb[0].mxu0
        %v1770 = vadd.f32 %v1561, %v1769
        %1771 = vmatprep.mubr.f32.mxu0 0.0
        %v1772 = vand.u32 %v204, 4294901760
        %1773 = vmatmul.mubr.f32.gmra.mrb[0].mxu0 %v1772
        %v1774 = vpop.f32.mrb[0].mxu0
        %v1775 = vadd.f32 %v1566, %v1774
        %v1776 = vpop.f32.mrb[0].mxu0
        %v1777 = vadd.f32 %v1568, %v1776
        %1778 = vmatprep.mubr.f32.mxu0 0.0
        %v1779 = vand.u32 %v205, 4294901760
        %1780 = vmatmul.mubr.f32.gmra.mrb[0].mxu0 %v1779
        %v1781 = vpop.f32.mrb[0].mxu0
        %v1782 = vadd.f32 %v1573, %v1781
        %v1783 = vpop.f32.mrb[0].mxu0
        %v1784 = vadd.f32 %v1575, %v1783
        %1785 = vmatprep.mubr.f32.mxu0 0.0
        %v1786 = vand.u32 %v206, 4294901760
        %1787 = vmatmul.mubr.f32.gmra.mrb[0].mxu0 %v1786
        %v1788 = vpop.f32.mrb[0].mxu0
        %v1789 = vadd.f32 %v1580, %v1788
        %v1790 = vpop.f32.mrb[0].mxu0
        %v1791 = vadd.f32 %v1582, %v1790
        %1792 = vmatprep.mubr.f32.mxu0 0.0
        %v1793 = vand.u32 %v207, 4294901760
        %1794 = vmatmul.mubr.f32.gmra.mrb[0].mxu0 %v1793
        %v1795 = vpop.f32.mrb[0].mxu0
        %v1796 = vadd.f32 %v1587, %v1795
        %v1797 = vpop.f32.mrb[0].mxu0
        %v1798 = vadd.f32 %v1589, %v1797
        %1799 = vmatprep.mubr.f32.mxu0 0.0
        %v1800 = vand.u32 %v208, 4294901760
        %1801 = vmatmul.mubr.f32.gmra.mrb[0].mxu0 %v1800
        %v1802 = vpop.f32.mrb[0].mxu0
        %v1803 = vadd.f32 %v1594, %v1802
        %v1804 = vpop.f32.mrb[0].mxu0
        %v1805 = vadd.f32 %v1596, %v1804
        %1806 = vmatprep.mubr.f32.mxu0 0.0
        %v1807 = vand.u32 %v209, 4294901760
        %1808 = vmatmul.mubr.f32.gmra.mrb[0].mxu0 %v1807
        %v1809 = vpop.f32.mrb[0].mxu0
        %v1810 = vadd.f32 %v1601, %v1809
        %v1811 = vpop.f32.mrb[0].mxu0
        %v1812 = vadd.f32 %v1603, %v1811
        %1813 = vmatprep.mubr.f32.mxu0 0.0
        %v1814 = vand.u32 %v210, 4294901760
        %1815 = vmatmul.mubr.f32.gmra.mrb[0].mxu0 %v1814
        %v1816 = vpop.f32.mrb[0].mxu0
        %v1817 = vadd.f32 %v1608, %v1816
        %v1818 = vpop.f32.mrb[0].mxu0
        %v1819 = vadd.f32 %v1610, %v1818
        %1820 = vmatprep.mubr.f32.mxu0 0.0
        %v1821 = vand.u32 %v211, 4294901760
        %1822 = vmatmul.mubr.f32.gmra.mrb[0].mxu0 %v1821
        %v1823 = vpop.f32.mrb[0].mxu0
        %v1824 = vadd.f32 %v1615, %v1823
        %v1825 = vpop.f32.mrb[0].mxu0
        %v1826 = vadd.f32 %v1617, %v1825
        %1827 = vmatprep.mubr.f32.mxu0 0.0
        %v1828 = vand.u32 %v212, 4294901760
        %1829 = vmatmul.mubr.f32.gmra.mrb[0].mxu0 %v1828
        %v1830 = vpop.f32.mrb[0].mxu0
        %v1831 = vadd.f32 %v1622, %v1830
        %v1832 = vpop.f32.mrb[0].mxu0
        %v1833 = vadd.f32 %v1624, %v1832
        %1834 = vdwg.mxu0
        %1835 = vst [vmem:[%s194] sm:$0xff] %v1726
        %1836 = vst [vmem:[%s194 + $0x8] sm:$0xff] %v1728
        %1837 = vst [vmem:[%s194 + $0x10] sm:$0xff] %v1733
        %1838 = vst [vmem:[%s194 + $0x18] sm:$0xff] %v1735
        %1839 = vst [vmem:[%s194 + $0x20] sm:$0xff] %v1740
        %1840 = vst [vmem:[%s194 + $0x28] sm:$0xff] %v1742
        %1841 = vst [vmem:[%s194 + $0x30] sm:$0xff] %v1747
        %1842 = vst [vmem:[%s194 + $0x38] sm:$0xff] %v1749
        %1843 = vst [vmem:[%s194 + $0x40] sm:$0xff] %v1754
        %1844 = vst [vmem:[%s194 + $0x48] sm:$0xff] %v1756
        %1845 = vst [vmem:[%s194 + $0x50] sm:$0xff] %v1761
        %1846 = vst [vmem:[%s194 + $0x58] sm:$0xff] %v1763
        %1847 = vst [vmem:[%s194 + $0x60] sm:$0xff] %v1768
        %1848 = vst [vmem:[%s194 + $0x68] sm:$0xff] %v1770
        %1849 = vst [vmem:[%s194 + $0x70] sm:$0xff] %v1775
        %1850 = vst [vmem:[%s194 + $0x78] sm:$0xff] %v1777
        %1851 = vst [vmem:[%s194 + $0x80] sm:$0xff] %v1782
        %1852 = vst [vmem:[%s194 + $0x88] sm:$0xff] %v1784
        %1853 = vst [vmem:[%s194 + $0x90] sm:$0xff] %v1789
        %1854 = vst [vmem:[%s194 + $0x98] sm:$0xff] %v1791
        %1855 = vst [vmem:[%s194 + $0xa0] sm:$0xff] %v1796
        %1856 = vst [vmem:[%s194 + $0xa8] sm:$0xff] %v1798
        %1857 = vst [vmem:[%s194 + $0xb0] sm:$0xff] %v1803
        %1858 = vst [vmem:[%s194 + $0xb8] sm:$0xff] %v1805
        %1859 = vst [vmem:[%s194 + $0xc0] sm:$0xff] %v1810
        %1860 = vst [vmem:[%s194 + $0xc8] sm:$0xff] %v1812
        %1861 = vst [vmem:[%s194 + $0xd0] sm:$0xff] %v1817
        %1862 = vst [vmem:[%s194 + $0xd8] sm:$0xff] %v1819
        %1863 = vst [vmem:[%s194 + $0xe0] sm:$0xff] %v1824
        %1864 = vst [vmem:[%s194 + $0xe8] sm:$0xff] %v1826
        %1865 = vst [vmem:[%s194 + $0xf0] sm:$0xff] %v1831
        %1866 = vst [vmem:[%s194 + $0xf8] sm:$0xff] %v1833
        %s1867 = sand.u32 %s91, 1
        %s1868 = scalar_lea.sflag [#allocation4], %s1867
        %s1869 = sand.u32 %s91, 1
        %s1870 = smul.addr %s1869, 256
        %s1871 = scalar_lea.vmem [#allocation7], %s1870
        // Predicated region
        $region37: #{tpu_custom_call.1} parent=27 // pred_check
          %p1872 = pneg %p101
        $region38: #{tpu_custom_call.1} parent=27 // pred_check_branch
          %1874 = sbr.rel (%p1872) target = $region40
        $region39: #{tpu_custom_call.1} parent=27 // pred_region
          %s1875 = smul.u32 2, %s25
          %s1877 = ssub.s32 4096, 4096
          %1878 = vsyncadd %s1868, %s1877
          %s1879 = smul.addr %s24, 32
          %s1880 = sadd.s32 %s1875, %s1879
          %s1881 = smul.addr %s1880, 128
          %s1882 = scalar_lea.hbm %s2, %s1881
          %s1883 = sshll.u32 %s1871, 4
          %s1884 = int_to_ptr.vmem [resolvable:$true] %s1883
          %1889 = dma.vmem_to_hbm [thread:$0]  %s1884, 4096, %s1882, %s1868, 256, 256, 16
        $region40: #{tpu_custom_call.1} parent=27 // pred_fallthru
          _
      $region28: #{tpu_custom_call.1} parent=5 // pred_fallthru
        _
      %p1890 = scmp.le.s32.totalorder 2, %s15
      // Predicated region
      $region41: #{tpu_custom_call.1} parent=5 // pred_check
        %p1891 = pneg %p1890
      $region42: #{tpu_custom_call.1} parent=5 // pred_check_branch
        %1893 = sbr.rel (%p1891) target = $region44
      $region43: #{tpu_custom_call.1} parent=5 // pred_region
        %s1894 = ssub.s32 %s15, 2
        // Predicated region
        $region45: #{tpu_custom_call.1} parent=43 // pred_check
          %p1895 = pneg %p107
        $region46: #{tpu_custom_call.1} parent=43 // pred_check_branch
          %1897 = sbr.rel (%p1895) target = $region48
        $region47: #{tpu_custom_call.1} parent=43 // pred_region
          %s1898 = sand.u32 %s92, 1
          %s1899 = scalar_lea.sflag [#allocation4], %s1898
          %s1900 = sand.u32 %s92, 1
          %s1901 = smul.addr %s1900, 256
          %s1902 = scalar_lea.vmem [#allocation7], %s1901
          %1903 = dma.done %s1899, 4096
        $region48: #{tpu_custom_call.1} parent=43 // pred_fallthru
          _
      $region44: #{tpu_custom_call.1} parent=5 // pred_fallthru
        _
    $region6: #{tpu_custom_call.1} parent=1 // loop_footer
      %s19 = sadd.s32 1, %s15
    $region7: #{tpu_custom_call.1} parent=1 // loop_footer_branch
      %14 = sbr.rel target = $region3
    $region8: #{tpu_custom_call.1} parent=1 // loop_exit
      _
    %1904 = vsyncpa [#allocation3], 1
    %s1905 = scalar_lea.sflag [#allocation3], 1
    %1906 = vsyncpa %s1905, 1
    %1907 = vsyncpa [#allocation6], 1
    %s1908 = scalar_lea.sflag [#allocation6], 1
    %1909 = vsyncpa %s1908, 1
    %1910 = vsyncpa [#allocation4], 1
    %s1911 = scalar_lea.sflag [#allocation4], 1
    %1912 = vsyncpa %s1911, 1

</llo_original>
